<compile_context>
chip_gen: v5e
topology: v5e:2x2
jax: 0.10.0
libtpu: 0.0.40
codegen_flags: <defaults>
</compile_context>

<pallas_src>
import functools
import numpy as np

import jax
import jax.numpy as jnp
from jax import lax
from jax.experimental import pallas as pl
from jax.experimental.pallas import tpu as pltpu

BN_EPS = 1e-5
BN_SCALE = float(1.0 / np.sqrt(1.0 + BN_EPS))   # eval-mode BatchNorm1d, default stats

_VMEM = pl.BlockSpec(memory_space=pltpu.MemorySpace.VMEM)


# ----------------------------- Pallas kernels ------------------------------

def _feature_kernel(xp_ref, w1_ref, b1_ref, w2_ref, b2_ref, w3_ref, b3_ref,
                    pe_ref, o_ref):
    """Fused: conv1+ReLU -> conv2+ReLU -> channel-major flatten -> Linear -> BN -> +PE.
    conv1 (tiny contraction depth) runs on the VPU as broadcast multiply-adds; conv2 /
    Linear are banded / row-permuted matmuls prepared on the host."""
    xp = xp_ref[...]                                    # (M, L+2) zero-padded 1-ch input
    w1 = w1_ref[...]                                    # (L+2, (L+2)*C1) banded conv1
    acc = jnp.broadcast_to(b1_ref[...], (xp.shape[0], w1.shape[1]))  # hoisted broadcast
    for j in range(xp.shape[1]):                        # K=6 -> VPU MACs, keep MXU free
        acc = acc + xp[:, j:j + 1] * w1[j:j + 1, :]
    y1 = jnp.maximum(acc, 0.0)                          # (M, (L+2)*C1); pad lanes stay 0

    # conv2 + ReLU as a banded block-Toeplitz matmul (includes 'same' padding)
    y2 = jnp.dot(y1, w2_ref[...], preferred_element_type=jnp.float32) + b2_ref[...]
    y2 = jnp.maximum(y2, 0.0)                           # (M, L*C2)

    # channel-major torch flatten folded into a row permutation of the nl2 weight,
    # then Linear + eval-mode BatchNorm1d + positional encoding.
    h = jnp.dot(y2, w3_ref[...], preferred_element_type=jnp.float32) + b3_ref[...]
    o_ref[...] = h * BN_SCALE + pe_ref[...]


def pallas_feature_extractor(xp, w1, b1, w2, b2, w3, b3, pe_rows):
    M = xp.shape[0]
    D = w3.shape[1]
    return pl.pallas_call(
        _feature_kernel,
        out_shape=jax.ShapeDtypeStruct((M, D), jnp.float32),
        in_specs=[_VMEM] * 8,
        out_specs=_VMEM,
    )(xp, w1, b1, w2, b2, w3, b3, pe_rows)


def _mpnn_kernel(a_ref, mask_ref, pool_ref, mw_ref, mb_ref, tw_ref, tb_ref, o_ref):
    """All BW graphs of one MPNN block in a single invocation (no per-graph grid).
    Graphs are stacked along the sublane axis; a block-diagonal mask keeps them
    independent.  Mean pooling over the window is folded into the last matmul."""
    a = a_ref[...]                                      # (R, D), R = BW * Nn
    mask = mask_ref[...]                                # (R, R) block-diag decay mask

    h = jnp.dot(a, mw_ref[...], preferred_element_type=jnp.float32) + mb_ref[...]
    xbn = a * BN_SCALE                                  # eval BatchNorm1d on node feats

    R = a.shape[0]
    row = lax.broadcasted_iota(jnp.int32, (R, R), 0)
    col = lax.broadcasted_iota(jnp.int32, (R, R), 1)
    eye = (row == col).astype(jnp.float32)

    # H @ H^T with the transpose absorbed into dot_general (no materialized h.T)
    s = lax.dot_general(h, h, (((1,), (1,)), ((), ())),
                        preferred_element_type=jnp.float32)
    s = s - eye * 1e8                                   # suppress self-loops
    s = jnp.where(s > 0, s, 0.01 * s)                   # leaky_relu
    s = jnp.where(mask > 0, s, -1e9)                    # restrict softmax to each graph
    s = s - jnp.max(s, axis=-1, keepdims=True)          # stable softmax(-1)
    e = jnp.exp(s)
    adj = e / jnp.sum(e, axis=-1, keepdims=True)
    adj = (adj + eye) * mask                            # + I, temporal decay pre-relation

    # 1-hop message passing + theta linear + eval-BN + leaky_relu
    agg = jnp.dot(adj, xbn, preferred_element_type=jnp.float32)
    out = jnp.dot(agg, tw_ref[...], preferred_element_type=jnp.float32) + tb_ref[...]
    out = out * BN_SCALE
    out = jnp.where(out > 0, out, 0.01 * out)

    # mean pooling over the time window as a matmul -> (bs*W*N, Dout)
    o_ref[...] = jnp.dot(pool_ref[...], out, preferred_element_type=jnp.float32)


def pallas_mpnn_block(a_flat, mask_big, pool_mat, map_w, map_b, theta_w, theta_b):
    Rout = pool_mat.shape[0]
    Dout = theta_w.shape[1]
    return pl.pallas_call(
        _mpnn_kernel,
        out_shape=jax.ShapeDtypeStruct((Rout, Dout), jnp.float32),
        in_specs=[_VMEM] * 7,
        out_specs=_VMEM,
    )(a_flat, mask_big, pool_mat, map_w, map_b, theta_w, theta_b)


def _fc_head_kernel(x_ref, w1, b1, w2, b2, w3, b3, w4, b4, o_ref):
    """fc1 -> ReLU -> fc2 -> ReLU -> fc3 -> ReLU -> fc4, fused (no HBM round-trips)."""
    f = jnp.dot(x_ref[...], w1[...], preferred_element_type=jnp.float32) + b1[...]
    f = jnp.maximum(f, 0.0)
    f = jnp.dot(f, w2[...], preferred_element_type=jnp.float32) + b2[...]
    f = jnp.maximum(f, 0.0)
    f = jnp.dot(f, w3[...], preferred_element_type=jnp.float32) + b3[...]
    f = jnp.maximum(f, 0.0)
    o_ref[...] = jnp.dot(f, w4[...], preferred_element_type=jnp.float32) + b4[...]


def pallas_fc_head(x, params):
    M = x.shape[0]
    n_class = params["fc4_w"].shape[1]
    return pl.pallas_call(
        _fc_head_kernel,
        out_shape=jax.ShapeDtypeStruct((M, n_class), jnp.float32),
        in_specs=[_VMEM] * 9,
        out_specs=_VMEM,
    )(x, params["fc1_w"], params["fc1_b"], params["fc2_w"], params["fc2_b"],
      params["fc3_w"], params["fc3_b"], params["fc4_w"], params["fc4_b"])


# ------------------------------- host helpers -------------------------------

def fft_for_period_host(x_np, k=2):
    """Host-side FFT_for_Period (matches torch: rfft over dim=1, topk of |xf| mean)."""
    xf = np.fft.rfft(x_np, axis=1)
    frequency_list = np.abs(xf).mean(0).mean(-1)
    frequency_list[0] = 0.0
    top_list = np.argsort(-frequency_list)[:k]
    period = x_np.shape[1] // top_list
    scale_weight = np.abs(xf).mean(-1)[:, top_list]
    return period, scale_weight


def positional_encoding_table(max_len, d_model):
    position = np.arange(max_len, dtype=np.float64)[:, None]
    div_term = np.exp(np.arange(0, d_model, 2, dtype=np.float64) * -(np.log(10000.0) / d_model))
    pe = np.zeros((max_len, d_model), dtype=np.float64)
    pe[:, 0::2] = np.sin(position * div_term)
    pe[:, 1::2] = np.cos(position * div_term)
    return pe.astype(np.float32)


def _mpnn_constants(bs, N, window, stride, T, decay):
    """Block-diagonal decay mask + mean-pooling matrix for one MPNN block (all static)."""
    W = (T - window) // stride + 1
    Nn = N * window
    BW = bs * W
    t = np.tile(np.arange(window), N).astype(np.float64)           # node-outer, time-inner
    decay_mask = np.power(decay, np.abs(t[:, None] - t[None, :]))
    mask_big = np.kron(np.eye(BW), decay_mask).astype(np.float32)  # (BW*Nn, BW*Nn)
    P = np.zeros((BW * N, BW * Nn), dtype=np.float32)               # mean over window
    for g in range(BW):
        for n in range(N):
            P[g * N + n, g * Nn + n * window: g * Nn + (n + 1) * window] = 1.0 / window
    return W, jnp.asarray(mask_big), jnp.asarray(P)


# ------------------------------- model pieces -------------------------------

def init_params(key, cfg):
    ks = jax.random.split(key, 16)

    def lin(k, fan_in, fan_out):
        s = 1.0 / np.sqrt(fan_in)
        kw, kb = jax.random.split(k)
        return (jax.random.uniform(kw, (fan_in, fan_out), jnp.float32, -s, s),
                jax.random.uniform(kb, (1, fan_out), jnp.float32, -s, s))

    p = {}
    kk = cfg["conv_kernel"]
    C1, C2, L = cfg["lstmhidden_dim"], cfg["lstmout_dim"], cfg["conv_out"]
    pad = kk // 2
    Lp = L + 2 * pad

    # TODO(synk): exact Feature_extractor_1DCNN_HAR_SSC body not provided; representative
    # 2-layer 1D CNN (1 -> lstmhidden -> lstmout) with 'same' padding and ReLU.
    conv1_w = np.asarray(jax.random.normal(ks[0], (kk, 1, C1), jnp.float32)) * 0.2
    conv1_b = np.zeros((C1,), np.float32)
    conv2_w = np.asarray(jax.random.normal(ks[1], (kk, C1, C2), jnp.float32)) * 0.2
    conv2_b = np.zeros((C2,), np.float32)
    nl2_w, nl2_b = lin(ks[2], C2 * L, 2 * cfg["hidden_dim"])

    # conv1 as a banded (Lp, Lp*C1) matrix on the zero-padded signal; output columns are
    # position-major ((l+pad)*C1 + c) and already contain conv2's zero padding.
    W1 = np.zeros((Lp, Lp * C1), np.float32)
    b1 = np.zeros((1, Lp * C1), np.float32)
    for l in range(L):
        for dk in range(kk):
            W1[l + dk, (l + pad) * C1:(l + pad + 1) * C1] = conv1_w[dk, 0, :]
        b1[0, (l + pad) * C1:(l + pad + 1) * C1] = conv1_b
    # conv2 as a banded block-Toeplitz (Lp*C1, L*C2) matrix
    W2 = np.zeros((Lp * C1, L * C2), np.float32)
    b2 = np.zeros((1, L * C2), np.float32)
    for l in range(L):
        for dk in range(kk):
            W2[(l + dk) * C1:(l + dk + 1) * C1, l * C2:(l + 1) * C2] = conv2_w[dk]
        b2[0, l * C2:(l + 1) * C2] = conv2_b
    # channel-major torch flatten (M, C, L) -> (M, C*L) folded into a row permutation
    # of the nl2 weight: kernel column j = l*C2 + c  <->  torch feature index c*L + l
    perm = np.array([(j % C2) * L + (j // C2) for j in range(L * C2)], np.int32)
    p["feat_w1"] = jnp.asarray(W1)
    p["feat_b1"] = jnp.asarray(b1)
    p["feat_w2"] = jnp.asarray(W2)
    p["feat_b2"] = jnp.asarray(b2)
    p["feat_w3"] = jnp.asarray(np.asarray(nl2_w)[perm, :])
    p["feat_b3"] = nl2_b

    D = 2 * cfg["hidden_dim"]
    for idx, name in enumerate(["mpnn1", "mpnn2"]):
        p[name + "_map_w"], p[name + "_map_b"] = lin(ks[3 + 2 * idx], D, D)
        p[name + "_theta_w"], p[name + "_theta_b"] = lin(ks[4 + 2 * idx], D, cfg["hidden_dim"])

    in_dim = cfg["hidden_dim"] * cfg["num_windows"] * cfg["num_nodes"]
    p["fc1_w"], p["fc1_b"] = lin(ks[9], in_dim, 2 * cfg["hidden_dim"])
    p["fc2_w"], p["fc2_b"] = lin(ks[10], 2 * cfg["hidden_dim"], 2 * cfg["hidden_dim"])
    p["fc3_w"], p["fc3_b"] = lin(ks[11], 2 * cfg["hidden_dim"], cfg["hidden_dim"])
    p["fc4_w"], p["fc4_b"] = lin(ks[12], cfg["hidden_dim"], cfg["n_class"])

    # TODO(synk): PositionalEncoding body not provided; standard sinusoidal PE over the
    # scale_num axis, dropout is identity in eval mode.
    p["pe"] = jnp.asarray(positional_encoding_table(5000, D))
    return p


def mpnn_block(x, params, name, window, stride, decay, cfg):
    """GraphConvpoolMPNN_block_v6: windowed graph construction + 1-hop MPNN + mean pool.
    x is interpreted as (bs, time_length, num_nodes, D)."""
    bs, T, N, D = x.shape
    W, mask_big, pool_mat = _mpnn_constants(bs, N, window, stride, T, decay)

    wins = [x[:, i * stride: i * stride + window] for i in range(W)]
    A = jnp.stack(wins, axis=1)                         # (bs, W, window, N, D)
    A = jnp.transpose(A, (0, 1, 3, 2, 4))               # (bs, W, N, window, D) node-outer
    a_flat = A.reshape(bs * W * N * window, D)

    pooled = pallas_mpnn_block(a_flat, mask_big, pool_mat,
                               params[name + "_map_w"], params[name + "_map_b"],
                               params[name + "_theta_w"], params[name + "_theta_b"])
    return pooled.reshape(bs, W * N * cfg["hidden_dim"])   # (bs, W*N*hidden), (w,n,h) order


def model_forward(params, x_enc, x_mark_enc, x_dec, x_mark_dec, *, cfg, scale):
    del x_mark_enc, x_dec, x_mark_dec                   # unused by the torch forward
    bs, seq_len, num_nodes = x_enc.shape
    scale_num = seq_len // scale
    pad = cfg["conv_kernel"] // 2
    D = 2 * cfg["hidden_dim"]

    # exact torch.reshape semantics (flat row-major reshapes, no transposes)
    x2d = x_enc.reshape(bs, scale_num, scale, num_nodes).reshape(
        bs * scale_num * num_nodes, scale)
    xp = jnp.pad(x2d, ((0, 0), (pad, pad)))             # 'same' conv padding, Cin=1

    # PE rows for the flattened (bs*scale_num*num_nodes) layout: row -> pe[scale index]
    pe_block = params["pe"][:scale_num]                 # (scale_num, D)
    pe_rows = jnp.tile(jnp.repeat(pe_block, num_nodes, axis=0), (bs, 1))

    # nonlin_map + nonlin_map2 + BN + positional encoding, one fused kernel
    h = pallas_feature_extractor(xp, params["feat_w1"], params["feat_b1"],
                                 params["feat_w2"], params["feat_b2"],
                                 params["feat_w3"], params["feat_b3"], pe_rows)

    # torch.reshape to (bs, num_nodes, scale_num, D), per the original forward
    X_ = h.reshape(bs, scale_num, num_nodes, D).reshape(bs, num_nodes, scale_num, D)

    f1 = mpnn_block(X_, params, "mpnn1", cfg["moving_window"][0], cfg["stride"][0],
                    cfg["decay"], cfg)
    f2 = mpnn_block(X_, params, "mpnn2", cfg["moving_window"][1], cfg["stride"][1],
                    cfg["decay"], cfg)

    features = jnp.concatenate([f1, f2], axis=-1)
    return pallas_fc_head(features, params)


# ----------------------------------- main -----------------------------------

if __name__ == "__main__":
    cfg = dict(
        seq_len=16, num_nodes=4, top_k=2,
        lstmhidden_dim=8, lstmout_dim=8, conv_kernel=3, conv_out=4,
        hidden_dim=16, time_denpen_len=4,
        moving_window=[2, 2], stride=[1, 2], num_windows=5,
        decay=0.5, pooling_choice="mean", n_class=3,
    )

    key = jax.random.PRNGKey(0)
    kx, kp = jax.random.split(key)
    bs = 2

    # Input with a dominant frequency at bin 4 so the FFT-chosen scale divides seq_len.
    t = np.arange(cfg["seq_len"], dtype=np.float32)
    base = np.sin(2.0 * np.pi * 4.0 * t / cfg["seq_len"])
    noise = np.asarray(jax.random.normal(kx, (bs, cfg["seq_len"], cfg["num_nodes"])), np.float32)
    x_enc = jnp.asarray(base[None, :, None] + 0.05 * noise, jnp.float32)
    x_mark_enc = jnp.zeros((bs, cfg["seq_len"], 4), jnp.float32)
    x_dec = jnp.zeros((bs, cfg["seq_len"], cfg["num_nodes"]), jnp.float32)
    x_mark_dec = jnp.zeros((bs, cfg["seq_len"], 4), jnp.float32)

    # FFT_for_Period (host side, like .detach().cpu().numpy() in torch)
    scale_list, scale_weight = fft_for_period_host(np.asarray(x_enc), cfg["top_k"])
    scale = int(scale_list[0])
    assert cfg["seq_len"] % scale == 0
    assert scale == cfg["conv_out"]

    params = init_params(kp, cfg)

    fwd = jax.jit(functools.partial(model_forward, cfg=cfg, scale=scale))
    out = fwd(params, x_enc, x_mark_enc, x_dec, x_mark_dec)
    out = jax.block_until_ready(out)

    assert out.shape == (bs, cfg["n_class"])
    assert np.all(np.isfinite(np.asarray(out)))
    print("KERNEL_OK")
</pallas_src>

<mosaic_0001>
module attributes {stable_mosaic.version = 11 : i64} {
  func.func @_mpnn_kernel(%arg0: memref<32x32xf32, #tpu.memory_space<vmem>>, %arg1: memref<32x32xf32, #tpu.memory_space<vmem>>, %arg2: memref<16x32xf32, #tpu.memory_space<vmem>>, %arg3: memref<32x32xf32, #tpu.memory_space<vmem>>, %arg4: memref<1x32xf32, #tpu.memory_space<vmem>>, %arg5: memref<32x16xf32, #tpu.memory_space<vmem>>, %arg6: memref<1x16xf32, #tpu.memory_space<vmem>>, %arg7: memref<16x16xf32, #tpu.memory_space<vmem>>) attributes {dimension_semantics = [], scalar_prefetch = 0 : i64, scratch_operands = 0 : i64, tpu.core_type = #tpu.core_type<tc>} {
    %c0 = arith.constant 0 : index
    %c0_0 = arith.constant 0 : index
    %0 = vector.load %arg0[%c0, %c0_0] : memref<32x32xf32, #tpu.memory_space<vmem>>, vector<32x32xf32>
    %c0_1 = arith.constant 0 : index
    %c0_2 = arith.constant 0 : index
    %1 = vector.load %arg1[%c0_1, %c0_2] : memref<32x32xf32, #tpu.memory_space<vmem>>, vector<32x32xf32>
    %c0_3 = arith.constant 0 : index
    %c0_4 = arith.constant 0 : index
    %2 = vector.load %arg3[%c0_3, %c0_4] : memref<32x32xf32, #tpu.memory_space<vmem>>, vector<32x32xf32>
    %cst = arith.constant dense<0.000000e+00> : vector<32x32xf32>
    %3 = tpu.matmul %0, %2, %cst {dimension_numbers = #tpu.dot_dimension_numbers<[1], [0], [0], [1], [0, 0, 1, 1], [], []>} : vector<32x32xf32>, vector<32x32xf32>, vector<32x32xf32> -> vector<32x32xf32>
    %c0_5 = arith.constant 0 : index
    %c0_6 = arith.constant 0 : index
    %4 = vector.load %arg4[%c0_5, %c0_6] : memref<1x32xf32, #tpu.memory_space<vmem>>, vector<1x32xf32>
    %5 = vector.broadcast %4 : vector<1x32xf32> to vector<32x32xf32>
    %6 = arith.addf %3, %5 : vector<32x32xf32>
    %cst_7 = arith.constant 0.999994993 : f32
    %7 = vector.broadcast %cst_7 : f32 to vector<32x32xf32>
    %8 = arith.mulf %0, %7 : vector<32x32xf32>
    %9 = tpu.iota {dimensions = array<i32: 0>} : vector<32x32xi32>
    %10 = tpu.iota {dimensions = array<i32: 1>} : vector<32x32xi32>
    %11 = arith.cmpi eq, %9, %10 : vector<32x32xi32>
    %12 = arith.extui %11 : vector<32x32xi1> to vector<32x32xi32>
    %13 = arith.sitofp %12 : vector<32x32xi32> to vector<32x32xf32>
    %cst_8 = arith.constant dense<0.000000e+00> : vector<32x32xf32>
    %14 = tpu.matmul %6, %6, %cst_8 {dimension_numbers = #tpu.dot_dimension_numbers<[1], [1], [0], [0], [0, 0, 1, 0], [], []>} : vector<32x32xf32>, vector<32x32xf32>, vector<32x32xf32> -> vector<32x32xf32>
    %cst_9 = arith.constant 1.000000e+08 : f32
    %15 = vector.broadcast %cst_9 : f32 to vector<32x32xf32>
    %16 = arith.mulf %13, %15 : vector<32x32xf32>
    %17 = arith.subf %14, %16 : vector<32x32xf32>
    %cst_10 = arith.constant 0.000000e+00 : f32
    %18 = vector.broadcast %cst_10 : f32 to vector<32x32xf32>
    %19 = arith.cmpf ogt, %17, %18 : vector<32x32xf32>
    %cst_11 = arith.constant 0.00999999977 : f32
    %20 = vector.broadcast %cst_11 : f32 to vector<32x32xf32>
    %21 = arith.mulf %20, %17 : vector<32x32xf32>
    %22 = arith.select %19, %17, %21 : vector<32x32xi1>, vector<32x32xf32>
    %cst_12 = arith.constant 0.000000e+00 : f32
    %23 = vector.broadcast %cst_12 : f32 to vector<32x32xf32>
    %24 = arith.cmpf ogt, %1, %23 : vector<32x32xf32>
    %cst_13 = arith.constant -1.000000e+09 : f32
    %25 = vector.broadcast %cst_13 : f32 to vector<32x32xf32>
    %26 = arith.select %24, %22, %25 : vector<32x32xi1>, vector<32x32xf32>
    %cst_14 = arith.constant dense<0xFF800000> : vector<32xf32>
    %27 = vector.multi_reduction <maximumf>, %26, %cst_14 [1] : vector<32x32xf32> to vector<32xf32>
    %28 = vector.shape_cast %27 : vector<32xf32> to vector<32x1xf32>
    %29 = vector.broadcast %28 : vector<32x1xf32> to vector<32x32xf32>
    %30 = arith.subf %26, %29 : vector<32x32xf32>
    %31 = math.exp %30 : vector<32x32xf32>
    %cst_15 = arith.constant dense<0.000000e+00> : vector<32xf32>
    %32 = vector.multi_reduction <add>, %31, %cst_15 [1] : vector<32x32xf32> to vector<32xf32>
    %33 = vector.shape_cast %32 : vector<32xf32> to vector<32x1xf32>
    %34 = vector.broadcast %33 : vector<32x1xf32> to vector<32x32xf32>
    %35 = arith.divf %31, %34 : vector<32x32xf32>
    %36 = arith.addf %35, %13 : vector<32x32xf32>
    %37 = arith.mulf %36, %1 : vector<32x32xf32>
    %cst_16 = arith.constant dense<0.000000e+00> : vector<32x32xf32>
    %38 = tpu.matmul %37, %8, %cst_16 {dimension_numbers = #tpu.dot_dimension_numbers<[1], [0], [0], [1], [0, 0, 1, 1], [], []>} : vector<32x32xf32>, vector<32x32xf32>, vector<32x32xf32> -> vector<32x32xf32>
    %c0_17 = arith.constant 0 : index
    %c0_18 = arith.constant 0 : index
    %39 = vector.load %arg5[%c0_17, %c0_18] : memref<32x16xf32, #tpu.memory_space<vmem>>, vector<32x16xf32>
    %cst_19 = arith.constant dense<0.000000e+00> : vector<32x16xf32>
    %40 = tpu.matmul %38, %39, %cst_19 {dimension_numbers = #tpu.dot_dimension_numbers<[1], [0], [0], [1], [0, 0, 1, 1], [], []>} : vector<32x32xf32>, vector<32x16xf32>, vector<32x16xf32> -> vector<32x16xf32>
    %c0_20 = arith.constant 0 : index
    %c0_21 = arith.constant 0 : index
    %41 = vector.load %arg6[%c0_20, %c0_21] : memref<1x16xf32, #tpu.memory_space<vmem>>, vector<1x16xf32>
    %42 = vector.broadcast %41 : vector<1x16xf32> to vector<32x16xf32>
    %43 = arith.addf %40, %42 : vector<32x16xf32>
    %cst_22 = arith.constant 0.999994993 : f32
    %44 = vector.broadcast %cst_22 : f32 to vector<32x16xf32>
    %45 = arith.mulf %43, %44 : vector<32x16xf32>
    %cst_23 = arith.constant 0.000000e+00 : f32
    %46 = vector.broadcast %cst_23 : f32 to vector<32x16xf32>
    %47 = arith.cmpf ogt, %45, %46 : vector<32x16xf32>
    %cst_24 = arith.constant 0.00999999977 : f32
    %48 = vector.broadcast %cst_24 : f32 to vector<32x16xf32>
    %49 = arith.mulf %48, %45 : vector<32x16xf32>
    %50 = arith.select %47, %45, %49 : vector<32x16xi1>, vector<32x16xf32>
    %c0_25 = arith.constant 0 : index
    %c0_26 = arith.constant 0 : index
    %51 = vector.load %arg2[%c0_25, %c0_26] : memref<16x32xf32, #tpu.memory_space<vmem>>, vector<16x32xf32>
    %cst_27 = arith.constant dense<0.000000e+00> : vector<16x16xf32>
    %52 = tpu.matmul %51, %50, %cst_27 {dimension_numbers = #tpu.dot_dimension_numbers<[1], [0], [0], [1], [0, 0, 1, 1], [], []>} : vector<16x32xf32>, vector<32x16xf32>, vector<16x16xf32> -> vector<16x16xf32>
    %c0_28 = arith.constant 0 : index
    %c0_29 = arith.constant 0 : index
    %53 = vector.load %arg7[%c0_28, %c0_29] : memref<16x16xf32, #tpu.memory_space<vmem>>, vector<16x16xf32>
    tpu.vector_store %arg7[%c0_28, %c0_29], %52 {strides = array<i32>} : memref<16x16xf32, #tpu.memory_space<vmem>>, vector<16x16xf32>,
    return
  }
}

module attributes {stable_mosaic.version = 11 : i64} {
  func.func @_feature_kernel(%arg0: memref<32x6xf32, #tpu.memory_space<vmem>>, %arg1: memref<6x48xf32, #tpu.memory_space<vmem>>, %arg2: memref<1x48xf32, #tpu.memory_space<vmem>>, %arg3: memref<48x32xf32, #tpu.memory_space<vmem>>, %arg4: memref<1x32xf32, #tpu.memory_space<vmem>>, %arg5: memref<32x32xf32, #tpu.memory_space<vmem>>, %arg6: memref<1x32xf32, #tpu.memory_space<vmem>>, %arg7: memref<32x32xf32, #tpu.memory_space<vmem>>, %arg8: memref<32x32xf32, #tpu.memory_space<vmem>>) attributes {dimension_semantics = [], scalar_prefetch = 0 : i64, scratch_operands = 0 : i64, tpu.core_type = #tpu.core_type<tc>} {
    %c0 = arith.constant 0 : index
    %c0_0 = arith.constant 0 : index
    %0 = vector.load %arg0[%c0, %c0_0] : memref<32x6xf32, #tpu.memory_space<vmem>>, vector<32x6xf32>
    %c0_1 = arith.constant 0 : index
    %c0_2 = arith.constant 0 : index
    %1 = vector.load %arg1[%c0_1, %c0_2] : memref<6x48xf32, #tpu.memory_space<vmem>>, vector<6x48xf32>
    %c0_3 = arith.constant 0 : index
    %c0_4 = arith.constant 0 : index
    %2 = vector.load %arg2[%c0_3, %c0_4] : memref<1x48xf32, #tpu.memory_space<vmem>>, vector<1x48xf32>
    %3 = vector.shape_cast %2 : vector<1x48xf32> to vector<1x48xf32>
    %4 = vector.broadcast %3 : vector<1x48xf32> to vector<32x48xf32>
    %5 = vector.extract_strided_slice %0 {offsets = [0, 0], sizes = [32, 1], strides = [1, 1]} : vector<32x6xf32> to vector<32x1xf32>
    %6 = vector.extract_strided_slice %1 {offsets = [0, 0], sizes = [1, 48], strides = [1, 1]} : vector<6x48xf32> to vector<1x48xf32>
    %7 = vector.broadcast %5 : vector<32x1xf32> to vector<32x48xf32>
    %8 = vector.broadcast %6 : vector<1x48xf32> to vector<32x48xf32>
    %9 = arith.mulf %7, %8 : vector<32x48xf32>
    %10 = arith.addf %4, %9 : vector<32x48xf32>
    %11 = vector.extract_strided_slice %0 {offsets = [0, 1], sizes = [32, 1], strides = [1, 1]} : vector<32x6xf32> to vector<32x1xf32>
    %12 = vector.extract_strided_slice %1 {offsets = [1, 0], sizes = [1, 48], strides = [1, 1]} : vector<6x48xf32> to vector<1x48xf32>
    %13 = vector.broadcast %11 : vector<32x1xf32> to vector<32x48xf32>
    %14 = vector.broadcast %12 : vector<1x48xf32> to vector<32x48xf32>
    %15 = arith.mulf %13, %14 : vector<32x48xf32>
    %16 = arith.addf %10, %15 : vector<32x48xf32>
    %17 = vector.extract_strided_slice %0 {offsets = [0, 2], sizes = [32, 1], strides = [1, 1]} : vector<32x6xf32> to vector<32x1xf32>
    %18 = vector.extract_strided_slice %1 {offsets = [2, 0], sizes = [1, 48], strides = [1, 1]} : vector<6x48xf32> to vector<1x48xf32>
    %19 = vector.broadcast %17 : vector<32x1xf32> to vector<32x48xf32>
    %20 = vector.broadcast %18 : vector<1x48xf32> to vector<32x48xf32>
    %21 = arith.mulf %19, %20 : vector<32x48xf32>
    %22 = arith.addf %16, %21 : vector<32x48xf32>
    %23 = vector.extract_strided_slice %0 {offsets = [0, 3], sizes = [32, 1], strides = [1, 1]} : vector<32x6xf32> to vector<32x1xf32>
    %24 = vector.extract_strided_slice %1 {offsets = [3, 0], sizes = [1, 48], strides = [1, 1]} : vector<6x48xf32> to vector<1x48xf32>
    %25 = vector.broadcast %23 : vector<32x1xf32> to vector<32x48xf32>
    %26 = vector.broadcast %24 : vector<1x48xf32> to vector<32x48xf32>
    %27 = arith.mulf %25, %26 : vector<32x48xf32>
    %28 = arith.addf %22, %27 : vector<32x48xf32>
    %29 = vector.extract_strided_slice %0 {offsets = [0, 4], sizes = [32, 1], strides = [1, 1]} : vector<32x6xf32> to vector<32x1xf32>
    %30 = vector.extract_strided_slice %1 {offsets = [4, 0], sizes = [1, 48], strides = [1, 1]} : vector<6x48xf32> to vector<1x48xf32>
    %31 = vector.broadcast %29 : vector<32x1xf32> to vector<32x48xf32>
    %32 = vector.broadcast %30 : vector<1x48xf32> to vector<32x48xf32>
    %33 = arith.mulf %31, %32 : vector<32x48xf32>
    %34 = arith.addf %28, %33 : vector<32x48xf32>
    %35 = vector.extract_strided_slice %0 {offsets = [0, 5], sizes = [32, 1], strides = [1, 1]} : vector<32x6xf32> to vector<32x1xf32>
    %36 = vector.extract_strided_slice %1 {offsets = [5, 0], sizes = [1, 48], strides = [1, 1]} : vector<6x48xf32> to vector<1x48xf32>
    %37 = vector.broadcast %35 : vector<32x1xf32> to vector<32x48xf32>
    %38 = vector.broadcast %36 : vector<1x48xf32> to vector<32x48xf32>
    %39 = arith.mulf %37, %38 : vector<32x48xf32>
    %40 = arith.addf %34, %39 : vector<32x48xf32>
    %cst = arith.constant 0.000000e+00 : f32
    %41 = vector.broadcast %cst : f32 to vector<32x48xf32>
    %42 = arith.maximumf %40, %41 : vector<32x48xf32>
    %c0_5 = arith.constant 0 : index
    %c0_6 = arith.constant 0 : index
    %43 = vector.load %arg3[%c0_5, %c0_6] : memref<48x32xf32, #tpu.memory_space<vmem>>, vector<48x32xf32>
    %cst_7 = arith.constant dense<0.000000e+00> : vector<32x32xf32>
    %44 = tpu.matmul %42, %43, %cst_7 {dimension_numbers = #tpu.dot_dimension_numbers<[1], [0], [0], [1], [0, 0, 1, 1], [], []>} : vector<32x48xf32>, vector<48x32xf32>, vector<32x32xf32> -> vector<32x32xf32>
    %c0_8 = arith.constant 0 : index
    %c0_9 = arith.constant 0 : index
    %45 = vector.load %arg4[%c0_8, %c0_9] : memref<1x32xf32, #tpu.memory_space<vmem>>, vector<1x32xf32>
    %46 = vector.broadcast %45 : vector<1x32xf32> to vector<32x32xf32>
    %47 = arith.addf %44, %46 : vector<32x32xf32>
    %cst_10 = arith.constant 0.000000e+00 : f32
    %48 = vector.broadcast %cst_10 : f32 to vector<32x32xf32>
    %49 = arith.maximumf %47, %48 : vector<32x32xf32>
    %c0_11 = arith.constant 0 : index
    %c0_12 = arith.constant 0 : index
    %50 = vector.load %arg5[%c0_11, %c0_12] : memref<32x32xf32, #tpu.memory_space<vmem>>, vector<32x32xf32>
    %cst_13 = arith.constant dense<0.000000e+00> : vector<32x32xf32>
    %51 = tpu.matmul %49, %50, %cst_13 {dimension_numbers = #tpu.dot_dimension_numbers<[1], [0], [0], [1], [0, 0, 1, 1], [], []>} : vector<32x32xf32>, vector<32x32xf32>, vector<32x32xf32> -> vector<32x32xf32>
    %c0_14 = arith.constant 0 : index
    %c0_15 = arith.constant 0 : index
    %52 = vector.load %arg6[%c0_14, %c0_15] : memref<1x32xf32, #tpu.memory_space<vmem>>, vector<1x32xf32>
    %53 = vector.broadcast %52 : vector<1x32xf32> to vector<32x32xf32>
    %54 = arith.addf %51, %53 : vector<32x32xf32>
    %cst_16 = arith.constant 0.999994993 : f32
    %55 = vector.broadcast %cst_16 : f32 to vector<32x32xf32>
    %56 = arith.mulf %54, %55 : vector<32x32xf32>
    %c0_17 = arith.constant 0 : index
    %c0_18 = arith.constant 0 : index
    %57 = vector.load %arg7[%c0_17, %c0_18] : memref<32x32xf32, #tpu.memory_space<vmem>>, vector<32x32xf32>
    %58 = arith.addf %56, %57 : vector<32x32xf32>
    %c0_19 = arith.constant 0 : index
    %c0_20 = arith.constant 0 : index
    %59 = vector.load %arg8[%c0_19, %c0_20] : memref<32x32xf32, #tpu.memory_space<vmem>>, vector<32x32xf32>
    tpu.vector_store %arg8[%c0_19, %c0_20], %58 {strides = array<i32>} : memref<32x32xf32, #tpu.memory_space<vmem>>, vector<32x32xf32>,
    return
  }
}

module attributes {stable_mosaic.version = 11 : i64} {
  func.func @_mpnn_kernel(%arg0: memref<48x32xf32, #tpu.memory_space<vmem>>, %arg1: memref<48x48xf32, #tpu.memory_space<vmem>>, %arg2: memref<24x48xf32, #tpu.memory_space<vmem>>, %arg3: memref<32x32xf32, #tpu.memory_space<vmem>>, %arg4: memref<1x32xf32, #tpu.memory_space<vmem>>, %arg5: memref<32x16xf32, #tpu.memory_space<vmem>>, %arg6: memref<1x16xf32, #tpu.memory_space<vmem>>, %arg7: memref<24x16xf32, #tpu.memory_space<vmem>>) attributes {dimension_semantics = [], scalar_prefetch = 0 : i64, scratch_operands = 0 : i64, tpu.core_type = #tpu.core_type<tc>} {
    %c0 = arith.constant 0 : index
    %c0_0 = arith.constant 0 : index
    %0 = vector.load %arg0[%c0, %c0_0] : memref<48x32xf32, #tpu.memory_space<vmem>>, vector<48x32xf32>
    %c0_1 = arith.constant 0 : index
    %c0_2 = arith.constant 0 : index
    %1 = vector.load %arg1[%c0_1, %c0_2] : memref<48x48xf32, #tpu.memory_space<vmem>>, vector<48x48xf32>
    %c0_3 = arith.constant 0 : index
    %c0_4 = arith.constant 0 : index
    %2 = vector.load %arg3[%c0_3, %c0_4] : memref<32x32xf32, #tpu.memory_space<vmem>>, vector<32x32xf32>
    %cst = arith.constant dense<0.000000e+00> : vector<48x32xf32>
    %3 = tpu.matmul %0, %2, %cst {dimension_numbers = #tpu.dot_dimension_numbers<[1], [0], [0], [1], [0, 0, 1, 1], [], []>} : vector<48x32xf32>, vector<32x32xf32>, vector<48x32xf32> -> vector<48x32xf32>
    %c0_5 = arith.constant 0 : index
    %c0_6 = arith.constant 0 : index
    %4 = vector.load %arg4[%c0_5, %c0_6] : memref<1x32xf32, #tpu.memory_space<vmem>>, vector<1x32xf32>
    %5 = vector.broadcast %4 : vector<1x32xf32> to vector<48x32xf32>
    %6 = arith.addf %3, %5 : vector<48x32xf32>
    %cst_7 = arith.constant 0.999994993 : f32
    %7 = vector.broadcast %cst_7 : f32 to vector<48x32xf32>
    %8 = arith.mulf %0, %7 : vector<48x32xf32>
    %9 = tpu.iota {dimensions = array<i32: 0>} : vector<48x48xi32>
    %10 = tpu.iota {dimensions = array<i32: 1>} : vector<48x48xi32>
    %11 = arith.cmpi eq, %9, %10 : vector<48x48xi32>
    %12 = arith.extui %11 : vector<48x48xi1> to vector<48x48xi32>
    %13 = arith.sitofp %12 : vector<48x48xi32> to vector<48x48xf32>
    %cst_8 = arith.constant dense<0.000000e+00> : vector<48x48xf32>
    %14 = tpu.matmul %6, %6, %cst_8 {dimension_numbers = #tpu.dot_dimension_numbers<[1], [1], [0], [0], [0, 0, 1, 0], [], []>} : vector<48x32xf32>, vector<48x32xf32>, vector<48x48xf32> -> vector<48x48xf32>
    %cst_9 = arith.constant 1.000000e+08 : f32
    %15 = vector.broadcast %cst_9 : f32 to vector<48x48xf32>
    %16 = arith.mulf %13, %15 : vector<48x48xf32>
    %17 = arith.subf %14, %16 : vector<48x48xf32>
    %cst_10 = arith.constant 0.000000e+00 : f32
    %18 = vector.broadcast %cst_10 : f32 to vector<48x48xf32>
    %19 = arith.cmpf ogt, %17, %18 : vector<48x48xf32>
    %cst_11 = arith.constant 0.00999999977 : f32
    %20 = vector.broadcast %cst_11 : f32 to vector<48x48xf32>
    %21 = arith.mulf %20, %17 : vector<48x48xf32>
    %22 = arith.select %19, %17, %21 : vector<48x48xi1>, vector<48x48xf32>
    %cst_12 = arith.constant 0.000000e+00 : f32
    %23 = vector.broadcast %cst_12 : f32 to vector<48x48xf32>
    %24 = arith.cmpf ogt, %1, %23 : vector<48x48xf32>
    %cst_13 = arith.constant -1.000000e+09 : f32
    %25 = vector.broadcast %cst_13 : f32 to vector<48x48xf32>
    %26 = arith.select %24, %22, %25 : vector<48x48xi1>, vector<48x48xf32>
    %cst_14 = arith.constant dense<0xFF800000> : vector<48xf32>
    %27 = vector.multi_reduction <maximumf>, %26, %cst_14 [1] : vector<48x48xf32> to vector<48xf32>
    %28 = vector.shape_cast %27 : vector<48xf32> to vector<48x1xf32>
    %29 = vector.broadcast %28 : vector<48x1xf32> to vector<48x48xf32>
    %30 = arith.subf %26, %29 : vector<48x48xf32>
    %31 = math.exp %30 : vector<48x48xf32>
    %cst_15 = arith.constant dense<0.000000e+00> : vector<48xf32>
    %32 = vector.multi_reduction <add>, %31, %cst_15 [1] : vector<48x48xf32> to vector<48xf32>
    %33 = vector.shape_cast %32 : vector<48xf32> to vector<48x1xf32>
    %34 = vector.broadcast %33 : vector<48x1xf32> to vector<48x48xf32>
    %35 = arith.divf %31, %34 : vector<48x48xf32>
    %36 = arith.addf %35, %13 : vector<48x48xf32>
    %37 = arith.mulf %36, %1 : vector<48x48xf32>
    %cst_16 = arith.constant dense<0.000000e+00> : vector<48x32xf32>
    %38 = tpu.matmul %37, %8, %cst_16 {dimension_numbers = #tpu.dot_dimension_numbers<[1], [0], [0], [1], [0, 0, 1, 1], [], []>} : vector<48x48xf32>, vector<48x32xf32>, vector<48x32xf32> -> vector<48x32xf32>
    %c0_17 = arith.constant 0 : index
    %c0_18 = arith.constant 0 : index
    %39 = vector.load %arg5[%c0_17, %c0_18] : memref<32x16xf32, #tpu.memory_space<vmem>>, vector<32x16xf32>
    %cst_19 = arith.constant dense<0.000000e+00> : vector<48x16xf32>
    %40 = tpu.matmul %38, %39, %cst_19 {dimension_numbers = #tpu.dot_dimension_numbers<[1], [0], [0], [1], [0, 0, 1, 1], [], []>} : vector<48x32xf32>, vector<32x16xf32>, vector<48x16xf32> -> vector<48x16xf32>
    %c0_20 = arith.constant 0 : index
    %c0_21 = arith.constant 0 : index
    %41 = vector.load %arg6[%c0_20, %c0_21] : memref<1x16xf32, #tpu.memory_space<vmem>>, vector<1x16xf32>
    %42 = vector.broadcast %41 : vector<1x16xf32> to vector<48x16xf32>
    %43 = arith.addf %40, %42 : vector<48x16xf32>
    %cst_22 = arith.constant 0.999994993 : f32
    %44 = vector.broadcast %cst_22 : f32 to vector<48x16xf32>
    %45 = arith.mulf %43, %44 : vector<48x16xf32>
    %cst_23 = arith.constant 0.000000e+00 : f32
    %46 = vector.broadcast %cst_23 : f32 to vector<48x16xf32>
    %47 = arith.cmpf ogt, %45, %46 : vector<48x16xf32>
    %cst_24 = arith.constant 0.00999999977 : f32
    %48 = vector.broadcast %cst_24 : f32 to vector<48x16xf32>
    %49 = arith.mulf %48, %45 : vector<48x16xf32>
    %50 = arith.select %47, %45, %49 : vector<48x16xi1>, vector<48x16xf32>
    %c0_25 = arith.constant 0 : index
    %c0_26 = arith.constant 0 : index
    %51 = vector.load %arg2[%c0_25, %c0_26] : memref<24x48xf32, #tpu.memory_space<vmem>>, vector<24x48xf32>
    %cst_27 = arith.constant dense<0.000000e+00> : vector<24x16xf32>
    %52 = tpu.matmul %51, %50, %cst_27 {dimension_numbers = #tpu.dot_dimension_numbers<[1], [0], [0], [1], [0, 0, 1, 1], [], []>} : vector<24x48xf32>, vector<48x16xf32>, vector<24x16xf32> -> vector<24x16xf32>
    %c0_28 = arith.constant 0 : index
    %c0_29 = arith.constant 0 : index
    %53 = vector.load %arg7[%c0_28, %c0_29] : memref<24x16xf32, #tpu.memory_space<vmem>>, vector<24x16xf32>
    tpu.vector_store %arg7[%c0_28, %c0_29], %52 {strides = array<i32>} : memref<24x16xf32, #tpu.memory_space<vmem>>, vector<24x16xf32>,
    return
  }
}

module attributes {stable_mosaic.version = 11 : i64} {
  func.func @_fc_head_kernel(%arg0: memref<2x320xf32, #tpu.memory_space<vmem>>, %arg1: memref<320x32xf32, #tpu.memory_space<vmem>>, %arg2: memref<1x32xf32, #tpu.memory_space<vmem>>, %arg3: memref<32x32xf32, #tpu.memory_space<vmem>>, %arg4: memref<1x32xf32, #tpu.memory_space<vmem>>, %arg5: memref<32x16xf32, #tpu.memory_space<vmem>>, %arg6: memref<1x16xf32, #tpu.memory_space<vmem>>, %arg7: memref<16x3xf32, #tpu.memory_space<vmem>>, %arg8: memref<1x3xf32, #tpu.memory_space<vmem>>, %arg9: memref<2x3xf32, #tpu.memory_space<vmem>>) attributes {dimension_semantics = [], scalar_prefetch = 0 : i64, scratch_operands = 0 : i64, tpu.core_type = #tpu.core_type<tc>} {
    %c0 = arith.constant 0 : index
    %c0_0 = arith.constant 0 : index
    %0 = vector.load %arg0[%c0, %c0_0] : memref<2x320xf32, #tpu.memory_space<vmem>>, vector<2x320xf32>
    %c0_1 = arith.constant 0 : index
    %c0_2 = arith.constant 0 : index
    %1 = vector.load %arg1[%c0_1, %c0_2] : memref<320x32xf32, #tpu.memory_space<vmem>>, vector<320x32xf32>
    %cst = arith.constant dense<0.000000e+00> : vector<2x32xf32>
    %2 = tpu.matmul %0, %1, %cst {dimension_numbers = #tpu.dot_dimension_numbers<[1], [0], [0], [1], [0, 0, 1, 1], [], []>} : vector<2x320xf32>, vector<320x32xf32>, vector<2x32xf32> -> vector<2x32xf32>
    %c0_3 = arith.constant 0 : index
    %c0_4 = arith.constant 0 : index
    %3 = vector.load %arg2[%c0_3, %c0_4] : memref<1x32xf32, #tpu.memory_space<vmem>>, vector<1x32xf32>
    %4 = vector.broadcast %3 : vector<1x32xf32> to vector<2x32xf32>
    %5 = arith.addf %2, %4 : vector<2x32xf32>
    %cst_5 = arith.constant 0.000000e+00 : f32
    %6 = vector.broadcast %cst_5 : f32 to vector<2x32xf32>
    %7 = arith.maximumf %5, %6 : vector<2x32xf32>
    %c0_6 = arith.constant 0 : index
    %c0_7 = arith.constant 0 : index
    %8 = vector.load %arg3[%c0_6, %c0_7] : memref<32x32xf32, #tpu.memory_space<vmem>>, vector<32x32xf32>
    %cst_8 = arith.constant dense<0.000000e+00> : vector<2x32xf32>
    %9 = tpu.matmul %7, %8, %cst_8 {dimension_numbers = #tpu.dot_dimension_numbers<[1], [0], [0], [1], [0, 0, 1, 1], [], []>} : vector<2x32xf32>, vector<32x32xf32>, vector<2x32xf32> -> vector<2x32xf32>
    %c0_9 = arith.constant 0 : index
    %c0_10 = arith.constant 0 : index
    %10 = vector.load %arg4[%c0_9, %c0_10] : memref<1x32xf32, #tpu.memory_space<vmem>>, vector<1x32xf32>
    %11 = vector.broadcast %10 : vector<1x32xf32> to vector<2x32xf32>
    %12 = arith.addf %9, %11 : vector<2x32xf32>
    %cst_11 = arith.constant 0.000000e+00 : f32
    %13 = vector.broadcast %cst_11 : f32 to vector<2x32xf32>
    %14 = arith.maximumf %12, %13 : vector<2x32xf32>
    %c0_12 = arith.constant 0 : index
    %c0_13 = arith.constant 0 : index
    %15 = vector.load %arg5[%c0_12, %c0_13] : memref<32x16xf32, #tpu.memory_space<vmem>>, vector<32x16xf32>
    %cst_14 = arith.constant dense<0.000000e+00> : vector<2x16xf32>
    %16 = tpu.matmul %14, %15, %cst_14 {dimension_numbers = #tpu.dot_dimension_numbers<[1], [0], [0], [1], [0, 0, 1, 1], [], []>} : vector<2x32xf32>, vector<32x16xf32>, vector<2x16xf32> -> vector<2x16xf32>
    %c0_15 = arith.constant 0 : index
    %c0_16 = arith.constant 0 : index
    %17 = vector.load %arg6[%c0_15, %c0_16] : memref<1x16xf32, #tpu.memory_space<vmem>>, vector<1x16xf32>
    %18 = vector.broadcast %17 : vector<1x16xf32> to vector<2x16xf32>
    %19 = arith.addf %16, %18 : vector<2x16xf32>
    %cst_17 = arith.constant 0.000000e+00 : f32
    %20 = vector.broadcast %cst_17 : f32 to vector<2x16xf32>
    %21 = arith.maximumf %19, %20 : vector<2x16xf32>
    %c0_18 = arith.constant 0 : index
    %c0_19 = arith.constant 0 : index
    %22 = vector.load %arg7[%c0_18, %c0_19] : memref<16x3xf32, #tpu.memory_space<vmem>>, vector<16x3xf32>
    %cst_20 = arith.constant dense<0.000000e+00> : vector<2x3xf32>
    %23 = tpu.matmul %21, %22, %cst_20 {dimension_numbers = #tpu.dot_dimension_numbers<[1], [0], [0], [1], [0, 0, 1, 1], [], []>} : vector<2x16xf32>, vector<16x3xf32>, vector<2x3xf32> -> vector<2x3xf32>
    %c0_21 = arith.constant 0 : index
    %c0_22 = arith.constant 0 : index
    %24 = vector.load %arg8[%c0_21, %c0_22] : memref<1x3xf32, #tpu.memory_space<vmem>>, vector<1x3xf32>
    %25 = vector.broadcast %24 : vector<1x3xf32> to vector<2x3xf32>
    %26 = arith.addf %23, %25 : vector<2x3xf32>
    %c0_23 = arith.constant 0 : index
    %c0_24 = arith.constant 0 : index
    %27 = vector.load %arg9[%c0_23, %c0_24] : memref<2x3xf32, #tpu.memory_space<vmem>>, vector<2x3xf32>
    tpu.vector_store %arg9[%c0_23, %c0_24], %26 {strides = array<i32>} : memref<2x3xf32, #tpu.memory_space<vmem>>, vector<2x3xf32>,
    return
  }
}

</mosaic_0001>

<llo_original>
// kernel: model_forward.4
$region0: #{model_forward.4}
  #allocation0 [shape = 'u32[]', space=smem, size = 0x4, offset = 0x4, fixed_abs, tag = 'smem constant byte address 0x4 - core index']
  #allocation1 [shape = 'u32[72,128]{1,0:T(1,128)}', space=vmem, size = 0x9000, scoped, tag = 'internal scratch']
  %s0 = inlined_call_operand.vmem [shape: f32[32,6], index: 0, kind: input, shape index: {}]
  %s1 = inlined_call_operand.vmem [shape: f32[6,48], index: 1, kind: input, shape index: {}]
  %s2 = inlined_call_operand.vmem [shape: f32[1,48], index: 2, kind: input, shape index: {}]
  %s3 = inlined_call_operand.vmem [shape: f32[48,32], index: 3, kind: input, shape index: {}]
  %s4 = inlined_call_operand.vmem [shape: f32[1,32], index: 4, kind: input, shape index: {}]
  %s5 = inlined_call_operand.vmem [shape: f32[32,32], index: 5, kind: input, shape index: {}]
  %s6 = inlined_call_operand.vmem [shape: f32[1,32], index: 6, kind: input, shape index: {}]
  %s7 = inlined_call_operand.vmem [shape: f32[32,32], index: 7, kind: input, shape index: {}]
  %s8 = inlined_call_operand.vmem [shape: f32[32,32], index: 8, kind: output, shape index: {}]
  %s9 = sld [smem:[#allocation0]]
  $region42: #{model_forward.4} parent=0
    _
  %s11 = ssub.s32 1, %s9
  %s12 = scalar_select 0, %s11, %s9
  // Predicated region
  $region2: #{model_forward.4} parent=0 // pred_check
    _
  $region3: #{model_forward.4} parent=0 // pred_check_branch
    %14 = sbr.rel (0) target = $region5
  $region4: #{model_forward.4} parent=0 // pred_region
    _
  $region5: #{model_forward.4} parent=0 // pred_fallthru
    _
  // Predicated region
  $region6: #{model_forward.4} parent=0 // pred_check
    _
  $region7: #{model_forward.4} parent=0 // pred_check_branch
    %16 = sbr.rel (0) target = $region9
  $region8: #{model_forward.4} parent=0 // pred_region
    _
  $region9: #{model_forward.4} parent=0 // pred_fallthru
    _
  // Predicated region
  $region10: #{model_forward.4} parent=0 // pred_check
    _
  $region11: #{model_forward.4} parent=0 // pred_check_branch
    %18 = sbr.rel (0) target = $region13
  $region12: #{model_forward.4} parent=0 // pred_region
    _
  $region13: #{model_forward.4} parent=0 // pred_fallthru
    _
  // Predicated region
  $region14: #{model_forward.4} parent=0 // pred_check
    _
  $region15: #{model_forward.4} parent=0 // pred_check_branch
    %20 = sbr.rel (0) target = $region17
  $region16: #{model_forward.4} parent=0 // pred_region
    _
  $region17: #{model_forward.4} parent=0 // pred_fallthru
    _
  // Predicated region
  $region18: #{model_forward.4} parent=0 // pred_check
    _
  $region19: #{model_forward.4} parent=0 // pred_check_branch
    %22 = sbr.rel (0) target = $region21
  $region20: #{model_forward.4} parent=0 // pred_region
    _
  $region21: #{model_forward.4} parent=0 // pred_fallthru
    _
  // Predicated region
  $region22: #{model_forward.4} parent=0 // pred_check
    _
  $region23: #{model_forward.4} parent=0 // pred_check_branch
    %24 = sbr.rel (0) target = $region25
  $region24: #{model_forward.4} parent=0 // pred_region
    _
  $region25: #{model_forward.4} parent=0 // pred_fallthru
    _
  // Predicated region
  $region26: #{model_forward.4} parent=0 // pred_check
    _
  $region27: #{model_forward.4} parent=0 // pred_check_branch
    %26 = sbr.rel (0) target = $region29
  $region28: #{model_forward.4} parent=0 // pred_region
    _
  $region29: #{model_forward.4} parent=0 // pred_fallthru
    _
  // Predicated region
  $region30: #{model_forward.4} parent=0 // pred_check
    _
  $region31: #{model_forward.4} parent=0 // pred_check_branch
    %28 = sbr.rel (0) target = $region33
  $region32: #{model_forward.4} parent=0 // pred_region
    _
  $region33: #{model_forward.4} parent=0 // pred_fallthru
    _
  %v29 = vld [vmem:[%s0] sm:$0xff]
  %v30 = vld [vmem:[%s0 + $0x8] sm:$0xff]
  %v31 = vld [vmem:[%s0 + $0x10] sm:$0xff]
  %v32 = vld [vmem:[%s0 + $0x18] sm:$0xff]
  %v33 = vld [vmem:[%s1] sm:$0x3f]
  %v34 = vld [vmem:[%s2] sm:$0x1]
  %v36 = vperm.slane %v34, 0
  %39 = vset.pattern.permute.xlu0 0
  %40 = vperm.xlu0 %39, %v29
  %v41 = vpop.permute.xlu0 %40
  %44 = vset.pattern.permute.xlu0 0
  %45 = vperm.xlu0 %44, %v30
  %v46 = vpop.permute.xlu0 %45
  %49 = vset.pattern.permute.xlu0 0
  %50 = vperm.xlu0 %49, %v31
  %v51 = vpop.permute.xlu0 %50
  %54 = vset.pattern.permute.xlu0 0
  %55 = vperm.xlu0 %54, %v32
  %v56 = vpop.permute.xlu0 %55
  %v58 = vperm.slane %v33, 0
  %v59 = vmul.f32 %v41, %v58
  %v60 = vmul.f32 %v46, %v58
  %v61 = vmul.f32 %v51, %v58
  %v62 = vmul.f32 %v56, %v58
  %v63 = vadd.f32 %v36, %v59
  %v64 = vadd.f32 %v36, %v60
  %v65 = vadd.f32 %v36, %v61
  %v66 = vadd.f32 %v36, %v62
  %67 = vset.pattern.permute.xlu0 1
  %68 = vperm.xlu0 %67, %v29
  %v69 = vpop.permute.xlu0 %68
  %71 = vset.pattern.permute.xlu0 1
  %72 = vperm.xlu0 %71, %v30
  %v73 = vpop.permute.xlu0 %72
  %75 = vset.pattern.permute.xlu0 1
  %76 = vperm.xlu0 %75, %v31
  %v77 = vpop.permute.xlu0 %76
  %79 = vset.pattern.permute.xlu0 1
  %80 = vperm.xlu0 %79, %v32
  %v81 = vpop.permute.xlu0 %80
  %v83 = vperm.slane %v33, 1
  %v84 = vmul.f32 %v69, %v83
  %v85 = vmul.f32 %v73, %v83
  %v86 = vmul.f32 %v77, %v83
  %v87 = vmul.f32 %v81, %v83
  %v88 = vadd.f32 %v63, %v84
  %v89 = vadd.f32 %v64, %v85
  %v90 = vadd.f32 %v65, %v86
  %v91 = vadd.f32 %v66, %v87
  %92 = vset.pattern.permute.xlu0 2
  %93 = vperm.xlu0 %92, %v29
  %v94 = vpop.permute.xlu0 %93
  %96 = vset.pattern.permute.xlu0 2
  %97 = vperm.xlu0 %96, %v30
  %v98 = vpop.permute.xlu0 %97
  %100 = vset.pattern.permute.xlu0 2
  %101 = vperm.xlu0 %100, %v31
  %v102 = vpop.permute.xlu0 %101
  %104 = vset.pattern.permute.xlu0 2
  %105 = vperm.xlu0 %104, %v32
  %v106 = vpop.permute.xlu0 %105
  %v108 = vperm.slane %v33, 2
  %v109 = vmul.f32 %v94, %v108
  %v110 = vmul.f32 %v98, %v108
  %v111 = vmul.f32 %v102, %v108
  %v112 = vmul.f32 %v106, %v108
  %v113 = vadd.f32 %v88, %v109
  %v114 = vadd.f32 %v89, %v110
  %v115 = vadd.f32 %v90, %v111
  %v116 = vadd.f32 %v91, %v112
  %117 = vset.pattern.permute.xlu0 3
  %118 = vperm.xlu0 %117, %v29
  %v119 = vpop.permute.xlu0 %118
  %121 = vset.pattern.permute.xlu0 3
  %122 = vperm.xlu0 %121, %v30
  %v123 = vpop.permute.xlu0 %122
  %125 = vset.pattern.permute.xlu0 3
  %126 = vperm.xlu0 %125, %v31
  %v127 = vpop.permute.xlu0 %126
  %129 = vset.pattern.permute.xlu0 3
  %130 = vperm.xlu0 %129, %v32
  %v131 = vpop.permute.xlu0 %130
  %v133 = vperm.slane %v33, 3
  %v134 = vmul.f32 %v119, %v133
  %v135 = vmul.f32 %v123, %v133
  %v136 = vmul.f32 %v127, %v133
  %v137 = vmul.f32 %v131, %v133
  %v138 = vadd.f32 %v113, %v134
  %v139 = vadd.f32 %v114, %v135
  %v140 = vadd.f32 %v115, %v136
  %v141 = vadd.f32 %v116, %v137
  %142 = vset.pattern.permute.xlu0 4
  %143 = vperm.xlu0 %142, %v29
  %v144 = vpop.permute.xlu0 %143
  %146 = vset.pattern.permute.xlu0 4
  %147 = vperm.xlu0 %146, %v30
  %v148 = vpop.permute.xlu0 %147
  %150 = vset.pattern.permute.xlu0 4
  %151 = vperm.xlu0 %150, %v31
  %v152 = vpop.permute.xlu0 %151
  %154 = vset.pattern.permute.xlu0 4
  %155 = vperm.xlu0 %154, %v32
  %v156 = vpop.permute.xlu0 %155
  %v158 = vperm.slane %v33, 4
  %v159 = vmul.f32 %v144, %v158
  %v160 = vmul.f32 %v148, %v158
  %v161 = vmul.f32 %v152, %v158
  %v162 = vmul.f32 %v156, %v158
  %v163 = vadd.f32 %v138, %v159
  %v164 = vadd.f32 %v139, %v160
  %v165 = vadd.f32 %v140, %v161
  %v166 = vadd.f32 %v141, %v162
  %167 = vset.pattern.permute.xlu0 5
  %168 = vperm.xlu0 %167, %v29
  %v169 = vpop.permute.xlu0 %168
  %171 = vset.pattern.permute.xlu0 5
  %172 = vperm.xlu0 %171, %v30
  %v173 = vpop.permute.xlu0 %172
  %175 = vset.pattern.permute.xlu0 5
  %176 = vperm.xlu0 %175, %v31
  %v177 = vpop.permute.xlu0 %176
  %179 = vset.pattern.permute.xlu0 5
  %180 = vperm.xlu0 %179, %v32
  %v181 = vpop.permute.xlu0 %180
  %v183 = vperm.slane %v33, 5
  %v184 = vmul.f32 %v169, %v183
  %v185 = vmul.f32 %v173, %v183
  %v186 = vmul.f32 %v177, %v183
  %v187 = vmul.f32 %v181, %v183
  %v188 = vadd.f32 %v163, %v184
  %v189 = vadd.f32 %v164, %v185
  %v190 = vadd.f32 %v165, %v186
  %v191 = vadd.f32 %v166, %v187
  %v192 = vmax.f32 %v188, 0.0
  %v193 = vmax.f32 %v189, 0.0
  %v194 = vmax.f32 %v190, 0.0
  %v195 = vmax.f32 %v191, 0.0
  %v196 = vld [vmem:[%s3] sm:$0xff]
  %v197 = vld [vmem:[%s3 + $0x8] sm:$0xff]
  %v198 = vld [vmem:[%s3 + $0x10] sm:$0xff]
  %v199 = vld [vmem:[%s3 + $0x18] sm:$0xff]
  %v200 = vld [vmem:[%s3 + $0x20] sm:$0xff]
  %v201 = vld [vmem:[%s3 + $0x28] sm:$0xff]
  %v202 = vld [vmem:[%s4] sm:$0x1]
  %v204 = vperm.slane %v202, 0
  %vm206 = vcmask 392192
  %v208 = vsel %vm206, %v192, 0
  %v211 = vsel %vm206, %v193, 0
  %v214 = vsel %vm206, %v194, 0
  %v217 = vsel %vm206, %v195, 0
  %219 = vmatpush.msra.mxu0 0.0
  %220 = vmatpush.msra.mxu0 0.0
  %221 = vmatpush.msra.mxu0 0.0
  %222 = vmatpush.msra.mxu0 0.0
  %223 = vmatpush.msra.mxu0 0.0
  %224 = vmatpush.msra.mxu0 0.0
  %225 = vmatpush.msra.mxu0 0.0
  %226 = vmatpush.msra.mxu0 0.0
  %227 = vmatpush.msra.mxu0 0.0
  %228 = vmatpush.msra.mxu0 0.0
  %229 = vmatpush.msra.mxu0 %v201
  %230 = vmatpush.msra.mxu0 %v200
  %231 = vmatpush.msra.mxu0 %v199
  %232 = vmatpush.msra.mxu0 %v198
  %233 = vmatpush.msra.mxu0 %v197
  %234 = vmatpush.msra.mxu0 %v196
  %235 = vmatmul.f32.gmra.mxu0 %v208
  %v236 = vpop.f32.mrf.mxu0
  %v237 = vadd.f32 %v204, %v236
  %238 = vmatmul.f32.gmra.mxu0 %v211
  %v239 = vpop.f32.mrf.mxu0
  %v240 = vadd.f32 %v204, %v239
  %241 = vmatmul.f32.gmra.mxu0 %v214
  %v242 = vpop.f32.mrf.mxu0
  %v243 = vadd.f32 %v204, %v242
  %244 = vmatmul.f32.gmra.mxu0 %v217
  %v245 = vpop.f32.mrf.mxu0
  %v246 = vadd.f32 %v204, %v245
  %247 = vdwg.mxu0
  %v248 = vmax.f32 %v237, 0.0
  %v249 = vmax.f32 %v240, 0.0
  %v250 = vmax.f32 %v243, 0.0
  %v251 = vmax.f32 %v246, 0.0
  %v252 = vld [vmem:[%s5] sm:$0xff]
  %v253 = vld [vmem:[%s5 + $0x8] sm:$0xff]
  %v254 = vld [vmem:[%s5 + $0x10] sm:$0xff]
  %v255 = vld [vmem:[%s5 + $0x18] sm:$0xff]
  %v256 = vld [vmem:[%s6] sm:$0x1]
  %v258 = vperm.slane %v256, 0
  %vm260 = vcmask 261120
  %v262 = vsel %vm260, %v248, 0
  %v265 = vsel %vm260, %v249, 0
  %v268 = vsel %vm260, %v250, 0
  %v271 = vsel %vm260, %v251, 0
  %273 = vmatpush.msra.mxu0 0.0
  %274 = vmatpush.msra.mxu0 0.0
  %275 = vmatpush.msra.mxu0 0.0
  %276 = vmatpush.msra.mxu0 0.0
  %277 = vmatpush.msra.mxu0 0.0
  %278 = vmatpush.msra.mxu0 0.0
  %279 = vmatpush.msra.mxu0 0.0
  %280 = vmatpush.msra.mxu0 0.0
  %281 = vmatpush.msra.mxu0 0.0
  %282 = vmatpush.msra.mxu0 0.0
  %283 = vmatpush.msra.mxu0 0.0
  %284 = vmatpush.msra.mxu0 0.0
  %285 = vmatpush.msra.mxu0 %v255
  %286 = vmatpush.msra.mxu0 %v254
  %287 = vmatpush.msra.mxu0 %v253
  %288 = vmatpush.msra.mxu0 %v252
  %289 = vmatmul.f32.gmra.mxu0 %v262
  %v290 = vpop.f32.mrf.mxu0
  %v291 = vadd.f32 %v258, %v290
  %292 = vmatmul.f32.gmra.mxu0 %v265
  %v293 = vpop.f32.mrf.mxu0
  %v294 = vadd.f32 %v258, %v293
  %295 = vmatmul.f32.gmra.mxu0 %v268
  %v296 = vpop.f32.mrf.mxu0
  %v297 = vadd.f32 %v258, %v296
  %298 = vmatmul.f32.gmra.mxu0 %v271
  %v299 = vpop.f32.mrf.mxu0
  %v300 = vadd.f32 %v258, %v299
  %301 = vdwg.mxu0
  %v302 = vmul.f32 %v291, 0.999995
  %v303 = vmul.f32 %v294, 0.999995
  %v304 = vmul.f32 %v297, 0.999995
  %v305 = vmul.f32 %v300, 0.999995
  %v306 = vld [vmem:[%s7] sm:$0xff]
  %v307 = vld [vmem:[%s7 + $0x8] sm:$0xff]
  %v308 = vld [vmem:[%s7 + $0x10] sm:$0xff]
  %v309 = vld [vmem:[%s7 + $0x18] sm:$0xff]
  %v310 = vadd.f32 %v302, %v306
  %v311 = vadd.f32 %v303, %v307
  %v312 = vadd.f32 %v304, %v308
  %v313 = vadd.f32 %v305, %v309
  %314 = vst.msk [vmem:[%s8] sm:$0xff] %vm260, %v310
  %315 = vst.msk [vmem:[%s8 + $0x8] sm:$0xff] %vm260, %v311
  %316 = vst.msk [vmem:[%s8 + $0x10] sm:$0xff] %vm260, %v312
  %317 = vst.msk [vmem:[%s8 + $0x18] sm:$0xff] %vm260, %v313
  // Predicated region
  $region34: #{model_forward.4} parent=0 // pred_check
    _
  $region35: #{model_forward.4} parent=0 // pred_check_branch
    %319 = sbr.rel (0) target = $region37
  $region36: #{model_forward.4} parent=0 // pred_region
    _
  $region37: #{model_forward.4} parent=0 // pred_fallthru
    _
  // Predicated region
  $region38: #{model_forward.4} parent=0 // pred_check
    _
  $region39: #{model_forward.4} parent=0 // pred_check_branch
    %321 = sbr.rel (0) target = $region41
  $region40: #{model_forward.4} parent=0 // pred_region
    _
  $region41: #{model_forward.4} parent=0 // pred_fallthru
    _

// kernel: model_forward.6
$region0: #{model_forward.6}
  #allocation0 [shape = 'u32[]', space=smem, size = 0x4, offset = 0x4, fixed_abs, tag = 'smem constant byte address 0x4 - core index']
  #allocation1 [shape = 'u32[72,128]{1,0:T(1,128)}', space=vmem, size = 0x9000, scoped, tag = 'internal scratch']
  %s0 = inlined_call_operand.vmem [shape: f32[32,32], index: 0, kind: input, shape index: {}]
  %s1 = inlined_call_operand.vmem [shape: f32[32,32], index: 1, kind: input, shape index: {}]
  %s2 = inlined_call_operand.vmem [shape: f32[16,32], index: 2, kind: input, shape index: {}]
  %s3 = inlined_call_operand.vmem [shape: f32[32,32], index: 3, kind: input, shape index: {}]
  %s4 = inlined_call_operand.vmem [shape: f32[1,32], index: 4, kind: input, shape index: {}]
  %s5 = inlined_call_operand.vmem [shape: f32[32,16], index: 5, kind: input, shape index: {}]
  %s6 = inlined_call_operand.vmem [shape: f32[1,16], index: 6, kind: input, shape index: {}]
  %s7 = inlined_call_operand.vmem [shape: f32[16,16], index: 7, kind: output, shape index: {}]
  %s8 = sld [smem:[#allocation0]]
  $region38: #{model_forward.6} parent=0
    _
  %s10 = ssub.s32 1, %s8
  %s11 = scalar_select 0, %s10, %s8
  // Predicated region
  $region2: #{model_forward.6} parent=0 // pred_check
    _
  $region3: #{model_forward.6} parent=0 // pred_check_branch
    %13 = sbr.rel (0) target = $region5
  $region4: #{model_forward.6} parent=0 // pred_region
    _
  $region5: #{model_forward.6} parent=0 // pred_fallthru
    _
  // Predicated region
  $region6: #{model_forward.6} parent=0 // pred_check
    _
  $region7: #{model_forward.6} parent=0 // pred_check_branch
    %15 = sbr.rel (0) target = $region9
  $region8: #{model_forward.6} parent=0 // pred_region
    _
  $region9: #{model_forward.6} parent=0 // pred_fallthru
    _
  // Predicated region
  $region10: #{model_forward.6} parent=0 // pred_check
    _
  $region11: #{model_forward.6} parent=0 // pred_check_branch
    %17 = sbr.rel (0) target = $region13
  $region12: #{model_forward.6} parent=0 // pred_region
    _
  $region13: #{model_forward.6} parent=0 // pred_fallthru
    _
  // Predicated region
  $region14: #{model_forward.6} parent=0 // pred_check
    _
  $region15: #{model_forward.6} parent=0 // pred_check_branch
    %19 = sbr.rel (0) target = $region17
  $region16: #{model_forward.6} parent=0 // pred_region
    _
  $region17: #{model_forward.6} parent=0 // pred_fallthru
    _
  // Predicated region
  $region18: #{model_forward.6} parent=0 // pred_check
    _
  $region19: #{model_forward.6} parent=0 // pred_check_branch
    %21 = sbr.rel (0) target = $region21
  $region20: #{model_forward.6} parent=0 // pred_region
    _
  $region21: #{model_forward.6} parent=0 // pred_fallthru
    _
  // Predicated region
  $region22: #{model_forward.6} parent=0 // pred_check
    _
  $region23: #{model_forward.6} parent=0 // pred_check_branch
    %23 = sbr.rel (0) target = $region25
  $region24: #{model_forward.6} parent=0 // pred_region
    _
  $region25: #{model_forward.6} parent=0 // pred_fallthru
    _
  // Predicated region
  $region26: #{model_forward.6} parent=0 // pred_check
    _
  $region27: #{model_forward.6} parent=0 // pred_check_branch
    %25 = sbr.rel (0) target = $region29
  $region28: #{model_forward.6} parent=0 // pred_region
    _
  $region29: #{model_forward.6} parent=0 // pred_fallthru
    _
  %v26 = vld [vmem:[%s0] sm:$0xff]
  %v27 = vld [vmem:[%s0 + $0x8] sm:$0xff]
  %v28 = vld [vmem:[%s0 + $0x10] sm:$0xff]
  %v29 = vld [vmem:[%s0 + $0x18] sm:$0xff]
  %v30 = vld [vmem:[%s1] sm:$0xff]
  %v31 = vld [vmem:[%s1 + $0x8] sm:$0xff]
  %v32 = vld [vmem:[%s1 + $0x10] sm:$0xff]
  %v33 = vld [vmem:[%s1 + $0x18] sm:$0xff]
  %v34 = vld [vmem:[%s3] sm:$0xff]
  %v35 = vld [vmem:[%s3 + $0x8] sm:$0xff]
  %v36 = vld [vmem:[%s3 + $0x10] sm:$0xff]
  %v37 = vld [vmem:[%s3 + $0x18] sm:$0xff]
  %v38 = vld [vmem:[%s4] sm:$0x1]
  %v40 = vperm.slane %v38, 0
  %vm42 = vcmask 261120
  %v44 = vsel %vm42, %v26, 0
  %v47 = vsel %vm42, %v27, 0
  %v50 = vsel %vm42, %v28, 0
  %v53 = vsel %vm42, %v29, 0
  %55 = vmatpush.msra.mxu0 0.0
  %56 = vmatpush.msra.mxu0 0.0
  %57 = vmatpush.msra.mxu0 0.0
  %58 = vmatpush.msra.mxu0 0.0
  %59 = vmatpush.msra.mxu0 0.0
  %60 = vmatpush.msra.mxu0 0.0
  %61 = vmatpush.msra.mxu0 0.0
  %62 = vmatpush.msra.mxu0 0.0
  %63 = vmatpush.msra.mxu0 0.0
  %64 = vmatpush.msra.mxu0 0.0
  %65 = vmatpush.msra.mxu0 0.0
  %66 = vmatpush.msra.mxu0 0.0
  %67 = vmatpush.msra.mxu0 %v37
  %68 = vmatpush.msra.mxu0 %v36
  %69 = vmatpush.msra.mxu0 %v35
  %70 = vmatpush.msra.mxu0 %v34
  %71 = vmatmul.f32.gmra.mxu0 %v44
  %v72 = vpop.f32.mrf.mxu0
  %v73 = vadd.f32 %v40, %v72
  %74 = vmatmul.f32.gmra.mxu0 %v47
  %v75 = vpop.f32.mrf.mxu0
  %v76 = vadd.f32 %v40, %v75
  %77 = vmatmul.f32.gmra.mxu0 %v50
  %v78 = vpop.f32.mrf.mxu0
  %v79 = vadd.f32 %v40, %v78
  %80 = vmatmul.f32.gmra.mxu0 %v53
  %v81 = vpop.f32.mrf.mxu0
  %v82 = vadd.f32 %v40, %v81
  %83 = vdwg.mxu0
  %v84 = vmul.f32 %v26, 0.999995
  %v85 = vmul.f32 %v27, 0.999995
  %v86 = vmul.f32 %v28, 0.999995
  %v87 = vmul.f32 %v29, 0.999995
  %v88 = vlaneseq
  %v89 = vshrl.u32 %v88, 7
  %v90 = vadd.s32 %v89, 8
  %v91 = vadd.s32 %v89, 16
  %v92 = vadd.s32 %v89, 24
  %v93 = vlaneseq
  %v94 = vand.u32 %v93, 127
  %vm95 = vcmp.eq.s32.totalorder %v89, %v94
  %vm96 = vcmp.eq.s32.totalorder %v90, %v94
  %vm97 = vcmp.eq.s32.totalorder %v91, %v94
  %vm98 = vcmp.eq.s32.totalorder %v92, %v94
  %v99 = vsel %vm95, 1, 0
  %v100 = vsel %vm96, 1, 0
  %v101 = vsel %vm97, 1, 0
  %v102 = vsel %vm98, 1, 0
  %v103 = vcvt.s32.f32 %v99
  %v104 = vcvt.s32.f32 %v100
  %v105 = vcvt.s32.f32 %v101
  %v106 = vcvt.s32.f32 %v102
  %v108 = vsel %vm42, %v73, 0
  %v111 = vsel %vm42, %v76, 0
  %v114 = vsel %vm42, %v79, 0
  %v117 = vsel %vm42, %v82, 0
  %119 = vmatpush.xpose.msra.mxu0 0.0
  %120 = vmatpush.xpose.msra.mxu0 0.0
  %121 = vmatpush.xpose.msra.mxu0 0.0
  %122 = vmatpush.xpose.msra.mxu0 0.0
  %123 = vmatpush.xpose.msra.mxu0 0.0
  %124 = vmatpush.xpose.msra.mxu0 0.0
  %125 = vmatpush.xpose.msra.mxu0 0.0
  %126 = vmatpush.xpose.msra.mxu0 0.0
  %127 = vmatpush.xpose.msra.mxu0 0.0
  %128 = vmatpush.xpose.msra.mxu0 0.0
  %129 = vmatpush.xpose.msra.mxu0 0.0
  %130 = vmatpush.xpose.msra.mxu0 0.0
  %131 = vmatpush.xpose.msra.mxu0 %v117
  %132 = vmatpush.xpose.msra.mxu0 %v114
  %133 = vmatpush.xpose.msra.mxu0 %v111
  %134 = vmatpush.xpose.msra.mxu0 %v108
  %135 = vmatmul.f32.gmra.mxu0 %v108
  %v136 = vpop.f32.mrf.mxu0
  %v137 = vadd.f32 0.0, %v136
  %138 = vmatmul.f32.gmra.mxu0 %v111
  %v139 = vpop.f32.mrf.mxu0
  %v140 = vadd.f32 0.0, %v139
  %141 = vmatmul.f32.gmra.mxu0 %v114
  %v142 = vpop.f32.mrf.mxu0
  %v143 = vadd.f32 0.0, %v142
  %144 = vmatmul.f32.gmra.mxu0 %v117
  %v145 = vpop.f32.mrf.mxu0
  %v146 = vadd.f32 0.0, %v145
  %147 = vdwg.mxu0
  %v148 = vmul.f32 %v103, 1e+08
  %v149 = vmul.f32 %v104, 1e+08
  %v150 = vmul.f32 %v105, 1e+08
  %v151 = vmul.f32 %v106, 1e+08
  %v152 = vsub.f32 %v137, %v148
  %v153 = vsub.f32 %v140, %v149
  %v154 = vsub.f32 %v143, %v150
  %v155 = vsub.f32 %v146, %v151
  %vm156 = vcmp.gt.f32.partialorder %v152, 0.0
  %vm157 = vcmp.gt.f32.partialorder %v153, 0.0
  %vm158 = vcmp.gt.f32.partialorder %v154, 0.0
  %vm159 = vcmp.gt.f32.partialorder %v155, 0.0
  %v160 = vmul.f32 %v152, 0.01
  %v161 = vmul.f32 %v153, 0.01
  %v162 = vmul.f32 %v154, 0.01
  %v163 = vmul.f32 %v155, 0.01
  %v164 = vsel %vm156, %v152, %v160
  %v165 = vsel %vm157, %v153, %v161
  %v166 = vsel %vm158, %v154, %v162
  %v167 = vsel %vm159, %v155, %v163
  %vm168 = vcmp.gt.f32.partialorder %v30, 0.0
  %vm169 = vcmp.gt.f32.partialorder %v31, 0.0
  %vm170 = vcmp.gt.f32.partialorder %v32, 0.0
  %vm171 = vcmp.gt.f32.partialorder %v33, 0.0
  %v172 = vsel %vm168, %v164, -1e+09
  %v173 = vsel %vm169, %v165, -1e+09
  %v174 = vsel %vm170, %v166, -1e+09
  %v175 = vsel %vm171, %v167, -1e+09
  %v176 = vsel %vm42, %v172, -inf
  %177 = vmax.xlane.f32.xlu0 %v176
  %v178 = vpop.xlane.xlu0 %177
  %v179 = vsel %vm42, %v173, -inf
  %180 = vmax.xlane.f32.xlu0 %v179
  %v181 = vpop.xlane.xlu0 %180
  %v182 = vsel %vm42, %v174, -inf
  %183 = vmax.xlane.f32.xlu0 %v182
  %v184 = vpop.xlane.xlu0 %183
  %v185 = vsel %vm42, %v175, -inf
  %186 = vmax.xlane.f32.xlu0 %v185
  %v187 = vpop.xlane.xlu0 %186
  %v188 = vsub.f32 %v172, %v178
  %v189 = vsub.f32 %v173, %v181
  %v190 = vsub.f32 %v174, %v184
  %v191 = vsub.f32 %v175, %v187
  %v192 = vmul.f32 %v188, 1.442695
  %v193 = vpow.pop %v192
  %v194 = vmul.f32 %v189, 1.442695
  %v195 = vpow.pop %v194
  %v196 = vmul.f32 %v190, 1.442695
  %v197 = vpow.pop %v196
  %v198 = vmul.f32 %v191, 1.442695
  %v199 = vpow.pop %v198
  %v200 = vsel %vm42, %v193, 0.0
  %201 = vadd.xlane.f32.xlu0 %v200
  %v202 = vpop.xlane.xlu0 %201
  %v203 = vsel %vm42, %v195, 0.0
  %204 = vadd.xlane.f32.xlu0 %v203
  %v205 = vpop.xlane.xlu0 %204
  %v206 = vsel %vm42, %v197, 0.0
  %207 = vadd.xlane.f32.xlu0 %v206
  %v208 = vpop.xlane.xlu0 %207
  %v209 = vsel %vm42, %v199, 0.0
  %210 = vadd.xlane.f32.xlu0 %v209
  %v211 = vpop.xlane.xlu0 %210
  %v212 = vrcp.pop %v202
  %v213 = vmul.f32 %v202, %v212
  %v214 = vsub.f32 1.0, %v213
  %v215 = vmul.f32 %v212, %v214
  %v216 = vadd.f32 %v212, %v215
  %vm217 = vweird.f32 %v202
  %vm218 = vweird.f32 %v212
  %vm219 = vmor %vm217, %vm218
  %v220 = vsel %vm219, %v212, %v216
  %v221 = vand.u32 2147483647, %v202
  %vm222 = vcmp.eq.f32.partialorder %v221, 8.507059e+37
  %v223 = vand.u32 %v202, 2147483648
  %v224 = vor.u32 1.1754944e-38, %v223
  %v225 = vsel %vm222, %v224, %v220
  %v226 = vmul.f32 %v193, %v225
  %v227 = vrcp.pop %v205
  %v228 = vmul.f32 %v205, %v227
  %v229 = vsub.f32 1.0, %v228
  %v230 = vmul.f32 %v227, %v229
  %v231 = vadd.f32 %v227, %v230
  %vm232 = vweird.f32 %v205
  %vm233 = vweird.f32 %v227
  %vm234 = vmor %vm232, %vm233
  %v235 = vsel %vm234, %v227, %v231
  %v236 = vand.u32 2147483647, %v205
  %vm237 = vcmp.eq.f32.partialorder %v236, 8.507059e+37
  %v238 = vand.u32 %v205, 2147483648
  %v239 = vor.u32 1.1754944e-38, %v238
  %v240 = vsel %vm237, %v239, %v235
  %v241 = vmul.f32 %v195, %v240
  %v242 = vrcp.pop %v208
  %v243 = vmul.f32 %v208, %v242
  %v244 = vsub.f32 1.0, %v243
  %v245 = vmul.f32 %v242, %v244
  %v246 = vadd.f32 %v242, %v245
  %vm247 = vweird.f32 %v208
  %vm248 = vweird.f32 %v242
  %vm249 = vmor %vm247, %vm248
  %v250 = vsel %vm249, %v242, %v246
  %v251 = vand.u32 2147483647, %v208
  %vm252 = vcmp.eq.f32.partialorder %v251, 8.507059e+37
  %v253 = vand.u32 %v208, 2147483648
  %v254 = vor.u32 1.1754944e-38, %v253
  %v255 = vsel %vm252, %v254, %v250
  %v256 = vmul.f32 %v197, %v255
  %v257 = vrcp.pop %v211
  %v258 = vmul.f32 %v211, %v257
  %v259 = vsub.f32 1.0, %v258
  %v260 = vmul.f32 %v257, %v259
  %v261 = vadd.f32 %v257, %v260
  %vm262 = vweird.f32 %v211
  %vm263 = vweird.f32 %v257
  %vm264 = vmor %vm262, %vm263
  %v265 = vsel %vm264, %v257, %v261
  %v266 = vand.u32 2147483647, %v211
  %vm267 = vcmp.eq.f32.partialorder %v266, 8.507059e+37
  %v268 = vand.u32 %v211, 2147483648
  %v269 = vor.u32 1.1754944e-38, %v268
  %v270 = vsel %vm267, %v269, %v265
  %v271 = vmul.f32 %v199, %v270
  %v272 = vadd.f32 %v226, %v103
  %v273 = vadd.f32 %v241, %v104
  %v274 = vadd.f32 %v256, %v105
  %v275 = vadd.f32 %v271, %v106
  %v276 = vmul.f32 %v272, %v30
  %v277 = vmul.f32 %v273, %v31
  %v278 = vmul.f32 %v274, %v32
  %v279 = vmul.f32 %v275, %v33
  %v281 = vsel %vm42, %v276, 0
  %v284 = vsel %vm42, %v277, 0
  %v287 = vsel %vm42, %v278, 0
  %v290 = vsel %vm42, %v279, 0
  %292 = vmatpush.msra.mxu0 0.0
  %293 = vmatpush.msra.mxu0 0.0
  %294 = vmatpush.msra.mxu0 0.0
  %295 = vmatpush.msra.mxu0 0.0
  %296 = vmatpush.msra.mxu0 0.0
  %297 = vmatpush.msra.mxu0 0.0
  %298 = vmatpush.msra.mxu0 0.0
  %299 = vmatpush.msra.mxu0 0.0
  %300 = vmatpush.msra.mxu0 0.0
  %301 = vmatpush.msra.mxu0 0.0
  %302 = vmatpush.msra.mxu0 0.0
  %303 = vmatpush.msra.mxu0 0.0
  %304 = vmatpush.msra.mxu0 %v87
  %305 = vmatpush.msra.mxu0 %v86
  %306 = vmatpush.msra.mxu0 %v85
  %307 = vmatpush.msra.mxu0 %v84
  %308 = vmatmul.f32.gmra.mxu0 %v281
  %v309 = vpop.f32.mrf.mxu0
  %v310 = vadd.f32 0.0, %v309
  %311 = vmatmul.f32.gmra.mxu0 %v284
  %v312 = vpop.f32.mrf.mxu0
  %v313 = vadd.f32 0.0, %v312
  %314 = vmatmul.f32.gmra.mxu0 %v287
  %v315 = vpop.f32.mrf.mxu0
  %v316 = vadd.f32 0.0, %v315
  %317 = vmatmul.f32.gmra.mxu0 %v290
  %v318 = vpop.f32.mrf.mxu0
  %v319 = vadd.f32 0.0, %v318
  %320 = vdwg.mxu0
  %v321 = vld [vmem:[%s5] sm:$0xff]
  %v322 = vld [vmem:[%s5 + $0x8] sm:$0xff]
  %v323 = vld [vmem:[%s5 + $0x10] sm:$0xff]
  %v324 = vld [vmem:[%s5 + $0x18] sm:$0xff]
  %v325 = vld [vmem:[%s6] sm:$0x1]
  %v327 = vperm.slane %v325, 0
  %v330 = vsel %vm42, %v310, 0
  %v333 = vsel %vm42, %v313, 0
  %v336 = vsel %vm42, %v316, 0
  %v339 = vsel %vm42, %v319, 0
  %341 = vmatpush.msra.mxu0 0.0
  %342 = vmatpush.msra.mxu0 0.0
  %343 = vmatpush.msra.mxu0 0.0
  %344 = vmatpush.msra.mxu0 0.0
  %345 = vmatpush.msra.mxu0 0.0
  %346 = vmatpush.msra.mxu0 0.0
  %347 = vmatpush.msra.mxu0 0.0
  %348 = vmatpush.msra.mxu0 0.0
  %349 = vmatpush.msra.mxu0 0.0
  %350 = vmatpush.msra.mxu0 0.0
  %351 = vmatpush.msra.mxu0 0.0
  %352 = vmatpush.msra.mxu0 0.0
  %353 = vmatpush.msra.mxu0 %v324
  %354 = vmatpush.msra.mxu0 %v323
  %355 = vmatpush.msra.mxu0 %v322
  %356 = vmatpush.msra.mxu0 %v321
  %357 = vmatmul.f32.gmra.mxu0 %v330
  %v358 = vpop.f32.mrf.mxu0
  %v359 = vadd.f32 %v327, %v358
  %360 = vmatmul.f32.gmra.mxu0 %v333
  %v361 = vpop.f32.mrf.mxu0
  %v362 = vadd.f32 %v327, %v361
  %363 = vmatmul.f32.gmra.mxu0 %v336
  %v364 = vpop.f32.mrf.mxu0
  %v365 = vadd.f32 %v327, %v364
  %366 = vmatmul.f32.gmra.mxu0 %v339
  %v367 = vpop.f32.mrf.mxu0
  %v368 = vadd.f32 %v327, %v367
  %369 = vdwg.mxu0
  %v370 = vmul.f32 %v359, 0.999995
  %v371 = vmul.f32 %v362, 0.999995
  %v372 = vmul.f32 %v365, 0.999995
  %v373 = vmul.f32 %v368, 0.999995
  %vm374 = vcmp.gt.f32.partialorder %v370, 0.0
  %vm375 = vcmp.gt.f32.partialorder %v371, 0.0
  %vm376 = vcmp.gt.f32.partialorder %v372, 0.0
  %vm377 = vcmp.gt.f32.partialorder %v373, 0.0
  %v378 = vmul.f32 %v370, 0.01
  %v379 = vmul.f32 %v371, 0.01
  %v380 = vmul.f32 %v372, 0.01
  %v381 = vmul.f32 %v373, 0.01
  %v382 = vsel %vm374, %v370, %v378
  %v383 = vsel %vm375, %v371, %v379
  %v384 = vsel %vm376, %v372, %v380
  %v385 = vsel %vm377, %v373, %v381
  %v386 = vld [vmem:[%s2] sm:$0xff]
  %v387 = vld [vmem:[%s2 + $0x8] sm:$0xff]
  %v389 = vsel %vm42, %v386, 0
  %v392 = vsel %vm42, %v387, 0
  %394 = vmatpush.msra.mxu0 0.0
  %395 = vmatpush.msra.mxu0 0.0
  %396 = vmatpush.msra.mxu0 0.0
  %397 = vmatpush.msra.mxu0 0.0
  %398 = vmatpush.msra.mxu0 0.0
  %399 = vmatpush.msra.mxu0 0.0
  %400 = vmatpush.msra.mxu0 0.0
  %401 = vmatpush.msra.mxu0 0.0
  %402 = vmatpush.msra.mxu0 0.0
  %403 = vmatpush.msra.mxu0 0.0
  %404 = vmatpush.msra.mxu0 0.0
  %405 = vmatpush.msra.mxu0 0.0
  %406 = vmatpush.msra.mxu0 %v385
  %407 = vmatpush.msra.mxu0 %v384
  %408 = vmatpush.msra.mxu0 %v383
  %409 = vmatpush.msra.mxu0 %v382
  %410 = vmatmul.f32.gmra.mxu0 %v389
  %v411 = vpop.f32.mrf.mxu0
  %v412 = vadd.f32 0.0, %v411
  %413 = vmatmul.f32.gmra.mxu0 %v392
  %v414 = vpop.f32.mrf.mxu0
  %v415 = vadd.f32 0.0, %v414
  %416 = vdwg.mxu0
  %vm417 = vcmask 130048
  %418 = vst.msk [vmem:[%s7] sm:$0xff] %vm417, %v412
  %419 = vst.msk [vmem:[%s7 + $0x8] sm:$0xff] %vm417, %v415
  // Predicated region
  $region30: #{model_forward.6} parent=0 // pred_check
    _
  $region31: #{model_forward.6} parent=0 // pred_check_branch
    %421 = sbr.rel (0) target = $region33
  $region32: #{model_forward.6} parent=0 // pred_region
    _
  $region33: #{model_forward.6} parent=0 // pred_fallthru
    _
  // Predicated region
  $region34: #{model_forward.6} parent=0 // pred_check
    _
  $region35: #{model_forward.6} parent=0 // pred_check_branch
    %423 = sbr.rel (0) target = $region37
  $region36: #{model_forward.6} parent=0 // pred_region
    _
  $region37: #{model_forward.6} parent=0 // pred_fallthru
    _

// kernel: model_forward.5
$region0: #{model_forward.5}
  #allocation0 [shape = 'u32[]', space=smem, size = 0x4, offset = 0x4, fixed_abs, tag = 'smem constant byte address 0x4 - core index']
  #allocation1 [shape = 'u32[72,128]{1,0:T(1,128)}', space=vmem, size = 0x9000, scoped, tag = 'internal scratch']
  %s0 = inlined_call_operand.vmem [shape: f32[48,32], index: 0, kind: input, shape index: {}]
  %s1 = inlined_call_operand.vmem [shape: f32[48,48], index: 1, kind: input, shape index: {}]
  %s2 = inlined_call_operand.vmem [shape: f32[24,48], index: 2, kind: input, shape index: {}]
  %s3 = inlined_call_operand.vmem [shape: f32[32,32], index: 3, kind: input, shape index: {}]
  %s4 = inlined_call_operand.vmem [shape: f32[1,32], index: 4, kind: input, shape index: {}]
  %s5 = inlined_call_operand.vmem [shape: f32[32,16], index: 5, kind: input, shape index: {}]
  %s6 = inlined_call_operand.vmem [shape: f32[1,16], index: 6, kind: input, shape index: {}]
  %s7 = inlined_call_operand.vmem [shape: f32[24,16], index: 7, kind: output, shape index: {}]
  %s8 = sld [smem:[#allocation0]]
  $region38: #{model_forward.5} parent=0
    _
  %s10 = ssub.s32 1, %s8
  %s11 = scalar_select 0, %s10, %s8
  // Predicated region
  $region2: #{model_forward.5} parent=0 // pred_check
    _
  $region3: #{model_forward.5} parent=0 // pred_check_branch
    %13 = sbr.rel (0) target = $region5
  $region4: #{model_forward.5} parent=0 // pred_region
    _
  $region5: #{model_forward.5} parent=0 // pred_fallthru
    _
  // Predicated region
  $region6: #{model_forward.5} parent=0 // pred_check
    _
  $region7: #{model_forward.5} parent=0 // pred_check_branch
    %15 = sbr.rel (0) target = $region9
  $region8: #{model_forward.5} parent=0 // pred_region
    _
  $region9: #{model_forward.5} parent=0 // pred_fallthru
    _
  // Predicated region
  $region10: #{model_forward.5} parent=0 // pred_check
    _
  $region11: #{model_forward.5} parent=0 // pred_check_branch
    %17 = sbr.rel (0) target = $region13
  $region12: #{model_forward.5} parent=0 // pred_region
    _
  $region13: #{model_forward.5} parent=0 // pred_fallthru
    _
  // Predicated region
  $region14: #{model_forward.5} parent=0 // pred_check
    _
  $region15: #{model_forward.5} parent=0 // pred_check_branch
    %19 = sbr.rel (0) target = $region17
  $region16: #{model_forward.5} parent=0 // pred_region
    _
  $region17: #{model_forward.5} parent=0 // pred_fallthru
    _
  // Predicated region
  $region18: #{model_forward.5} parent=0 // pred_check
    _
  $region19: #{model_forward.5} parent=0 // pred_check_branch
    %21 = sbr.rel (0) target = $region21
  $region20: #{model_forward.5} parent=0 // pred_region
    _
  $region21: #{model_forward.5} parent=0 // pred_fallthru
    _
  // Predicated region
  $region22: #{model_forward.5} parent=0 // pred_check
    _
  $region23: #{model_forward.5} parent=0 // pred_check_branch
    %23 = sbr.rel (0) target = $region25
  $region24: #{model_forward.5} parent=0 // pred_region
    _
  $region25: #{model_forward.5} parent=0 // pred_fallthru
    _
  // Predicated region
  $region26: #{model_forward.5} parent=0 // pred_check
    _
  $region27: #{model_forward.5} parent=0 // pred_check_branch
    %25 = sbr.rel (0) target = $region29
  $region28: #{model_forward.5} parent=0 // pred_region
    _
  $region29: #{model_forward.5} parent=0 // pred_fallthru
    _
  %v26 = vld [vmem:[%s0] sm:$0xff]
  %v27 = vld [vmem:[%s0 + $0x8] sm:$0xff]
  %v28 = vld [vmem:[%s0 + $0x10] sm:$0xff]
  %v29 = vld [vmem:[%s0 + $0x18] sm:$0xff]
  %v30 = vld [vmem:[%s0 + $0x20] sm:$0xff]
  %v31 = vld [vmem:[%s0 + $0x28] sm:$0xff]
  %v32 = vld [vmem:[%s1] sm:$0xff]
  %v33 = vld [vmem:[%s1 + $0x8] sm:$0xff]
  %v34 = vld [vmem:[%s1 + $0x10] sm:$0xff]
  %v35 = vld [vmem:[%s1 + $0x18] sm:$0xff]
  %v36 = vld [vmem:[%s1 + $0x20] sm:$0xff]
  %v37 = vld [vmem:[%s1 + $0x28] sm:$0xff]
  %v38 = vld [vmem:[%s3] sm:$0xff]
  %v39 = vld [vmem:[%s3 + $0x8] sm:$0xff]
  %v40 = vld [vmem:[%s3 + $0x10] sm:$0xff]
  %v41 = vld [vmem:[%s3 + $0x18] sm:$0xff]
  %v42 = vld [vmem:[%s4] sm:$0x1]
  %v44 = vperm.slane %v42, 0
  %vm46 = vcmask 261120
  %v48 = vsel %vm46, %v26, 0
  %v51 = vsel %vm46, %v27, 0
  %v54 = vsel %vm46, %v28, 0
  %v57 = vsel %vm46, %v29, 0
  %v60 = vsel %vm46, %v30, 0
  %v63 = vsel %vm46, %v31, 0
  %65 = vmatpush.msra.mxu0 0.0
  %66 = vmatpush.msra.mxu0 0.0
  %67 = vmatpush.msra.mxu0 0.0
  %68 = vmatpush.msra.mxu0 0.0
  %69 = vmatpush.msra.mxu0 0.0
  %70 = vmatpush.msra.mxu0 0.0
  %71 = vmatpush.msra.mxu0 0.0
  %72 = vmatpush.msra.mxu0 0.0
  %73 = vmatpush.msra.mxu0 0.0
  %74 = vmatpush.msra.mxu0 0.0
  %75 = vmatpush.msra.mxu0 0.0
  %76 = vmatpush.msra.mxu0 0.0
  %77 = vmatpush.msra.mxu0 %v41
  %78 = vmatpush.msra.mxu0 %v40
  %79 = vmatpush.msra.mxu0 %v39
  %80 = vmatpush.msra.mxu0 %v38
  %81 = vmatmul.f32.gmra.mxu0 %v48
  %v82 = vpop.f32.mrf.mxu0
  %v83 = vadd.f32 %v44, %v82
  %84 = vmatmul.f32.gmra.mxu0 %v51
  %v85 = vpop.f32.mrf.mxu0
  %v86 = vadd.f32 %v44, %v85
  %87 = vmatmul.f32.gmra.mxu0 %v54
  %v88 = vpop.f32.mrf.mxu0
  %v89 = vadd.f32 %v44, %v88
  %90 = vmatmul.f32.gmra.mxu0 %v57
  %v91 = vpop.f32.mrf.mxu0
  %v92 = vadd.f32 %v44, %v91
  %93 = vmatmul.f32.gmra.mxu0 %v60
  %v94 = vpop.f32.mrf.mxu0
  %v95 = vadd.f32 %v44, %v94
  %96 = vmatmul.f32.gmra.mxu0 %v63
  %v97 = vpop.f32.mrf.mxu0
  %v98 = vadd.f32 %v44, %v97
  %99 = vdwg.mxu0
  %v100 = vmul.f32 %v26, 0.999995
  %v101 = vmul.f32 %v27, 0.999995
  %v102 = vmul.f32 %v28, 0.999995
  %v103 = vmul.f32 %v29, 0.999995
  %v104 = vmul.f32 %v30, 0.999995
  %v105 = vmul.f32 %v31, 0.999995
  %v106 = vlaneseq
  %v107 = vshrl.u32 %v106, 7
  %v108 = vadd.s32 %v107, 8
  %v109 = vadd.s32 %v107, 16
  %v110 = vadd.s32 %v107, 24
  %v111 = vadd.s32 %v107, 32
  %v112 = vadd.s32 %v107, 40
  %v113 = vlaneseq
  %v114 = vand.u32 %v113, 127
  %vm115 = vcmp.eq.s32.totalorder %v107, %v114
  %vm116 = vcmp.eq.s32.totalorder %v108, %v114
  %vm117 = vcmp.eq.s32.totalorder %v109, %v114
  %vm118 = vcmp.eq.s32.totalorder %v110, %v114
  %vm119 = vcmp.eq.s32.totalorder %v111, %v114
  %vm120 = vcmp.eq.s32.totalorder %v112, %v114
  %v121 = vsel %vm115, 1, 0
  %v122 = vsel %vm116, 1, 0
  %v123 = vsel %vm117, 1, 0
  %v124 = vsel %vm118, 1, 0
  %v125 = vsel %vm119, 1, 0
  %v126 = vsel %vm120, 1, 0
  %v127 = vcvt.s32.f32 %v121
  %v128 = vcvt.s32.f32 %v122
  %v129 = vcvt.s32.f32 %v123
  %v130 = vcvt.s32.f32 %v124
  %v131 = vcvt.s32.f32 %v125
  %v132 = vcvt.s32.f32 %v126
  %v134 = vsel %vm46, %v83, 0
  %v137 = vsel %vm46, %v86, 0
  %v140 = vsel %vm46, %v89, 0
  %v143 = vsel %vm46, %v92, 0
  %v146 = vsel %vm46, %v95, 0
  %v149 = vsel %vm46, %v98, 0
  %151 = vmatpush.xpose.msra.mxu0 0.0
  %152 = vmatpush.xpose.msra.mxu0 0.0
  %153 = vmatpush.xpose.msra.mxu0 0.0
  %154 = vmatpush.xpose.msra.mxu0 0.0
  %155 = vmatpush.xpose.msra.mxu0 0.0
  %156 = vmatpush.xpose.msra.mxu0 0.0
  %157 = vmatpush.xpose.msra.mxu0 0.0
  %158 = vmatpush.xpose.msra.mxu0 0.0
  %159 = vmatpush.xpose.msra.mxu0 0.0
  %160 = vmatpush.xpose.msra.mxu0 0.0
  %161 = vmatpush.xpose.msra.mxu0 %v149
  %162 = vmatpush.xpose.msra.mxu0 %v146
  %163 = vmatpush.xpose.msra.mxu0 %v143
  %164 = vmatpush.xpose.msra.mxu0 %v140
  %165 = vmatpush.xpose.msra.mxu0 %v137
  %166 = vmatpush.xpose.msra.mxu0 %v134
  %167 = vmatmul.f32.gmra.mxu0 %v134
  %v168 = vpop.f32.mrf.mxu0
  %v169 = vadd.f32 0.0, %v168
  %170 = vmatmul.f32.gmra.mxu0 %v137
  %v171 = vpop.f32.mrf.mxu0
  %v172 = vadd.f32 0.0, %v171
  %173 = vmatmul.f32.gmra.mxu0 %v140
  %v174 = vpop.f32.mrf.mxu0
  %v175 = vadd.f32 0.0, %v174
  %176 = vmatmul.f32.gmra.mxu0 %v143
  %v177 = vpop.f32.mrf.mxu0
  %v178 = vadd.f32 0.0, %v177
  %179 = vmatmul.f32.gmra.mxu0 %v146
  %v180 = vpop.f32.mrf.mxu0
  %v181 = vadd.f32 0.0, %v180
  %182 = vmatmul.f32.gmra.mxu0 %v149
  %v183 = vpop.f32.mrf.mxu0
  %v184 = vadd.f32 0.0, %v183
  %185 = vdwg.mxu0
  %v186 = vmul.f32 %v127, 1e+08
  %v187 = vmul.f32 %v128, 1e+08
  %v188 = vmul.f32 %v129, 1e+08
  %v189 = vmul.f32 %v130, 1e+08
  %v190 = vmul.f32 %v131, 1e+08
  %v191 = vmul.f32 %v132, 1e+08
  %v192 = vsub.f32 %v169, %v186
  %v193 = vsub.f32 %v172, %v187
  %v194 = vsub.f32 %v175, %v188
  %v195 = vsub.f32 %v178, %v189
  %v196 = vsub.f32 %v181, %v190
  %v197 = vsub.f32 %v184, %v191
  %vm198 = vcmp.gt.f32.partialorder %v192, 0.0
  %vm199 = vcmp.gt.f32.partialorder %v193, 0.0
  %vm200 = vcmp.gt.f32.partialorder %v194, 0.0
  %vm201 = vcmp.gt.f32.partialorder %v195, 0.0
  %vm202 = vcmp.gt.f32.partialorder %v196, 0.0
  %vm203 = vcmp.gt.f32.partialorder %v197, 0.0
  %v204 = vmul.f32 %v192, 0.01
  %v205 = vmul.f32 %v193, 0.01
  %v206 = vmul.f32 %v194, 0.01
  %v207 = vmul.f32 %v195, 0.01
  %v208 = vmul.f32 %v196, 0.01
  %v209 = vmul.f32 %v197, 0.01
  %v210 = vsel %vm198, %v192, %v204
  %v211 = vsel %vm199, %v193, %v205
  %v212 = vsel %vm200, %v194, %v206
  %v213 = vsel %vm201, %v195, %v207
  %v214 = vsel %vm202, %v196, %v208
  %v215 = vsel %vm203, %v197, %v209
  %vm216 = vcmp.gt.f32.partialorder %v32, 0.0
  %vm217 = vcmp.gt.f32.partialorder %v33, 0.0
  %vm218 = vcmp.gt.f32.partialorder %v34, 0.0
  %vm219 = vcmp.gt.f32.partialorder %v35, 0.0
  %vm220 = vcmp.gt.f32.partialorder %v36, 0.0
  %vm221 = vcmp.gt.f32.partialorder %v37, 0.0
  %v222 = vsel %vm216, %v210, -1e+09
  %v223 = vsel %vm217, %v211, -1e+09
  %v224 = vsel %vm218, %v212, -1e+09
  %v225 = vsel %vm219, %v213, -1e+09
  %v226 = vsel %vm220, %v214, -1e+09
  %v227 = vsel %vm221, %v215, -1e+09
  %vm228 = vcmask 392192
  %v229 = vsel %vm228, %v222, -inf
  %230 = vmax.xlane.f32.xlu0 %v229
  %v231 = vpop.xlane.xlu0 %230
  %v232 = vsel %vm228, %v223, -inf
  %233 = vmax.xlane.f32.xlu0 %v232
  %v234 = vpop.xlane.xlu0 %233
  %v235 = vsel %vm228, %v224, -inf
  %236 = vmax.xlane.f32.xlu0 %v235
  %v237 = vpop.xlane.xlu0 %236
  %v238 = vsel %vm228, %v225, -inf
  %239 = vmax.xlane.f32.xlu0 %v238
  %v240 = vpop.xlane.xlu0 %239
  %v241 = vsel %vm228, %v226, -inf
  %242 = vmax.xlane.f32.xlu0 %v241
  %v243 = vpop.xlane.xlu0 %242
  %v244 = vsel %vm228, %v227, -inf
  %245 = vmax.xlane.f32.xlu0 %v244
  %v246 = vpop.xlane.xlu0 %245
  %v247 = vsub.f32 %v222, %v231
  %v248 = vsub.f32 %v223, %v234
  %v249 = vsub.f32 %v224, %v237
  %v250 = vsub.f32 %v225, %v240
  %v251 = vsub.f32 %v226, %v243
  %v252 = vsub.f32 %v227, %v246
  %v253 = vmul.f32 %v247, 1.442695
  %v254 = vpow.pop %v253
  %v255 = vmul.f32 %v248, 1.442695
  %v256 = vpow.pop %v255
  %v257 = vmul.f32 %v249, 1.442695
  %v258 = vpow.pop %v257
  %v259 = vmul.f32 %v250, 1.442695
  %v260 = vpow.pop %v259
  %v261 = vmul.f32 %v251, 1.442695
  %v262 = vpow.pop %v261
  %v263 = vmul.f32 %v252, 1.442695
  %v264 = vpow.pop %v263
  %v265 = vsel %vm228, %v254, 0.0
  %266 = vadd.xlane.f32.xlu0 %v265
  %v267 = vpop.xlane.xlu0 %266
  %v268 = vsel %vm228, %v256, 0.0
  %269 = vadd.xlane.f32.xlu0 %v268
  %v270 = vpop.xlane.xlu0 %269
  %v271 = vsel %vm228, %v258, 0.0
  %272 = vadd.xlane.f32.xlu0 %v271
  %v273 = vpop.xlane.xlu0 %272
  %v274 = vsel %vm228, %v260, 0.0
  %275 = vadd.xlane.f32.xlu0 %v274
  %v276 = vpop.xlane.xlu0 %275
  %v277 = vsel %vm228, %v262, 0.0
  %278 = vadd.xlane.f32.xlu0 %v277
  %v279 = vpop.xlane.xlu0 %278
  %v280 = vsel %vm228, %v264, 0.0
  %281 = vadd.xlane.f32.xlu0 %v280
  %v282 = vpop.xlane.xlu0 %281
  %v283 = vrcp.pop %v267
  %v284 = vmul.f32 %v267, %v283
  %v285 = vsub.f32 1.0, %v284
  %v286 = vmul.f32 %v283, %v285
  %v287 = vadd.f32 %v283, %v286
  %vm288 = vweird.f32 %v267
  %vm289 = vweird.f32 %v283
  %vm290 = vmor %vm288, %vm289
  %v291 = vsel %vm290, %v283, %v287
  %v292 = vand.u32 2147483647, %v267
  %vm293 = vcmp.eq.f32.partialorder %v292, 8.507059e+37
  %v294 = vand.u32 %v267, 2147483648
  %v295 = vor.u32 1.1754944e-38, %v294
  %v296 = vsel %vm293, %v295, %v291
  %v297 = vmul.f32 %v254, %v296
  %v298 = vrcp.pop %v270
  %v299 = vmul.f32 %v270, %v298
  %v300 = vsub.f32 1.0, %v299
  %v301 = vmul.f32 %v298, %v300
  %v302 = vadd.f32 %v298, %v301
  %vm303 = vweird.f32 %v270
  %vm304 = vweird.f32 %v298
  %vm305 = vmor %vm303, %vm304
  %v306 = vsel %vm305, %v298, %v302
  %v307 = vand.u32 2147483647, %v270
  %vm308 = vcmp.eq.f32.partialorder %v307, 8.507059e+37
  %v309 = vand.u32 %v270, 2147483648
  %v310 = vor.u32 1.1754944e-38, %v309
  %v311 = vsel %vm308, %v310, %v306
  %v312 = vmul.f32 %v256, %v311
  %v313 = vrcp.pop %v273
  %v314 = vmul.f32 %v273, %v313
  %v315 = vsub.f32 1.0, %v314
  %v316 = vmul.f32 %v313, %v315
  %v317 = vadd.f32 %v313, %v316
  %vm318 = vweird.f32 %v273
  %vm319 = vweird.f32 %v313
  %vm320 = vmor %vm318, %vm319
  %v321 = vsel %vm320, %v313, %v317
  %v322 = vand.u32 2147483647, %v273
  %vm323 = vcmp.eq.f32.partialorder %v322, 8.507059e+37
  %v324 = vand.u32 %v273, 2147483648
  %v325 = vor.u32 1.1754944e-38, %v324
  %v326 = vsel %vm323, %v325, %v321
  %v327 = vmul.f32 %v258, %v326
  %v328 = vrcp.pop %v276
  %v329 = vmul.f32 %v276, %v328
  %v330 = vsub.f32 1.0, %v329
  %v331 = vmul.f32 %v328, %v330
  %v332 = vadd.f32 %v328, %v331
  %vm333 = vweird.f32 %v276
  %vm334 = vweird.f32 %v328
  %vm335 = vmor %vm333, %vm334
  %v336 = vsel %vm335, %v328, %v332
  %v337 = vand.u32 2147483647, %v276
  %vm338 = vcmp.eq.f32.partialorder %v337, 8.507059e+37
  %v339 = vand.u32 %v276, 2147483648
  %v340 = vor.u32 1.1754944e-38, %v339
  %v341 = vsel %vm338, %v340, %v336
  %v342 = vmul.f32 %v260, %v341
  %v343 = vrcp.pop %v279
  %v344 = vmul.f32 %v279, %v343
  %v345 = vsub.f32 1.0, %v344
  %v346 = vmul.f32 %v343, %v345
  %v347 = vadd.f32 %v343, %v346
  %vm348 = vweird.f32 %v279
  %vm349 = vweird.f32 %v343
  %vm350 = vmor %vm348, %vm349
  %v351 = vsel %vm350, %v343, %v347
  %v352 = vand.u32 2147483647, %v279
  %vm353 = vcmp.eq.f32.partialorder %v352, 8.507059e+37
  %v354 = vand.u32 %v279, 2147483648
  %v355 = vor.u32 1.1754944e-38, %v354
  %v356 = vsel %vm353, %v355, %v351
  %v357 = vmul.f32 %v262, %v356
  %v358 = vrcp.pop %v282
  %v359 = vmul.f32 %v282, %v358
  %v360 = vsub.f32 1.0, %v359
  %v361 = vmul.f32 %v358, %v360
  %v362 = vadd.f32 %v358, %v361
  %vm363 = vweird.f32 %v282
  %vm364 = vweird.f32 %v358
  %vm365 = vmor %vm363, %vm364
  %v366 = vsel %vm365, %v358, %v362
  %v367 = vand.u32 2147483647, %v282
  %vm368 = vcmp.eq.f32.partialorder %v367, 8.507059e+37
  %v369 = vand.u32 %v282, 2147483648
  %v370 = vor.u32 1.1754944e-38, %v369
  %v371 = vsel %vm368, %v370, %v366
  %v372 = vmul.f32 %v264, %v371
  %v373 = vadd.f32 %v297, %v127
  %v374 = vadd.f32 %v312, %v128
  %v375 = vadd.f32 %v327, %v129
  %v376 = vadd.f32 %v342, %v130
  %v377 = vadd.f32 %v357, %v131
  %v378 = vadd.f32 %v372, %v132
  %v379 = vmul.f32 %v373, %v32
  %v380 = vmul.f32 %v374, %v33
  %v381 = vmul.f32 %v375, %v34
  %v382 = vmul.f32 %v376, %v35
  %v383 = vmul.f32 %v377, %v36
  %v384 = vmul.f32 %v378, %v37
  %v386 = vsel %vm228, %v379, 0
  %v389 = vsel %vm228, %v380, 0
  %v392 = vsel %vm228, %v381, 0
  %v395 = vsel %vm228, %v382, 0
  %v398 = vsel %vm228, %v383, 0
  %v401 = vsel %vm228, %v384, 0
  %403 = vmatpush.msra.mxu0 0.0
  %404 = vmatpush.msra.mxu0 0.0
  %405 = vmatpush.msra.mxu0 0.0
  %406 = vmatpush.msra.mxu0 0.0
  %407 = vmatpush.msra.mxu0 0.0
  %408 = vmatpush.msra.mxu0 0.0
  %409 = vmatpush.msra.mxu0 0.0
  %410 = vmatpush.msra.mxu0 0.0
  %411 = vmatpush.msra.mxu0 0.0
  %412 = vmatpush.msra.mxu0 0.0
  %413 = vmatpush.msra.mxu0 %v105
  %414 = vmatpush.msra.mxu0 %v104
  %415 = vmatpush.msra.mxu0 %v103
  %416 = vmatpush.msra.mxu0 %v102
  %417 = vmatpush.msra.mxu0 %v101
  %418 = vmatpush.msra.mxu0 %v100
  %419 = vmatmul.f32.gmra.mxu0 %v386
  %v420 = vpop.f32.mrf.mxu0
  %v421 = vadd.f32 0.0, %v420
  %422 = vmatmul.f32.gmra.mxu0 %v389
  %v423 = vpop.f32.mrf.mxu0
  %v424 = vadd.f32 0.0, %v423
  %425 = vmatmul.f32.gmra.mxu0 %v392
  %v426 = vpop.f32.mrf.mxu0
  %v427 = vadd.f32 0.0, %v426
  %428 = vmatmul.f32.gmra.mxu0 %v395
  %v429 = vpop.f32.mrf.mxu0
  %v430 = vadd.f32 0.0, %v429
  %431 = vmatmul.f32.gmra.mxu0 %v398
  %v432 = vpop.f32.mrf.mxu0
  %v433 = vadd.f32 0.0, %v432
  %434 = vmatmul.f32.gmra.mxu0 %v401
  %v435 = vpop.f32.mrf.mxu0
  %v436 = vadd.f32 0.0, %v435
  %437 = vdwg.mxu0
  %v438 = vld [vmem:[%s5] sm:$0xff]
  %v439 = vld [vmem:[%s5 + $0x8] sm:$0xff]
  %v440 = vld [vmem:[%s5 + $0x10] sm:$0xff]
  %v441 = vld [vmem:[%s5 + $0x18] sm:$0xff]
  %v442 = vld [vmem:[%s6] sm:$0x1]
  %v444 = vperm.slane %v442, 0
  %v447 = vsel %vm46, %v421, 0
  %v450 = vsel %vm46, %v424, 0
  %v453 = vsel %vm46, %v427, 0
  %v456 = vsel %vm46, %v430, 0
  %v459 = vsel %vm46, %v433, 0
  %v462 = vsel %vm46, %v436, 0
  %464 = vmatpush.msra.mxu0 0.0
  %465 = vmatpush.msra.mxu0 0.0
  %466 = vmatpush.msra.mxu0 0.0
  %467 = vmatpush.msra.mxu0 0.0
  %468 = vmatpush.msra.mxu0 0.0
  %469 = vmatpush.msra.mxu0 0.0
  %470 = vmatpush.msra.mxu0 0.0
  %471 = vmatpush.msra.mxu0 0.0
  %472 = vmatpush.msra.mxu0 0.0
  %473 = vmatpush.msra.mxu0 0.0
  %474 = vmatpush.msra.mxu0 0.0
  %475 = vmatpush.msra.mxu0 0.0
  %476 = vmatpush.msra.mxu0 %v441
  %477 = vmatpush.msra.mxu0 %v440
  %478 = vmatpush.msra.mxu0 %v439
  %479 = vmatpush.msra.mxu0 %v438
  %480 = vmatmul.f32.gmra.mxu0 %v447
  %v481 = vpop.f32.mrf.mxu0
  %v482 = vadd.f32 %v444, %v481
  %483 = vmatmul.f32.gmra.mxu0 %v450
  %v484 = vpop.f32.mrf.mxu0
  %v485 = vadd.f32 %v444, %v484
  %486 = vmatmul.f32.gmra.mxu0 %v453
  %v487 = vpop.f32.mrf.mxu0
  %v488 = vadd.f32 %v444, %v487
  %489 = vmatmul.f32.gmra.mxu0 %v456
  %v490 = vpop.f32.mrf.mxu0
  %v491 = vadd.f32 %v444, %v490
  %492 = vmatmul.f32.gmra.mxu0 %v459
  %v493 = vpop.f32.mrf.mxu0
  %v494 = vadd.f32 %v444, %v493
  %495 = vmatmul.f32.gmra.mxu0 %v462
  %v496 = vpop.f32.mrf.mxu0
  %v497 = vadd.f32 %v444, %v496
  %498 = vdwg.mxu0
  %v499 = vmul.f32 %v482, 0.999995
  %v500 = vmul.f32 %v485, 0.999995
  %v501 = vmul.f32 %v488, 0.999995
  %v502 = vmul.f32 %v491, 0.999995
  %v503 = vmul.f32 %v494, 0.999995
  %v504 = vmul.f32 %v497, 0.999995
  %vm505 = vcmp.gt.f32.partialorder %v499, 0.0
  %vm506 = vcmp.gt.f32.partialorder %v500, 0.0
  %vm507 = vcmp.gt.f32.partialorder %v501, 0.0
  %vm508 = vcmp.gt.f32.partialorder %v502, 0.0
  %vm509 = vcmp.gt.f32.partialorder %v503, 0.0
  %vm510 = vcmp.gt.f32.partialorder %v504, 0.0
  %v511 = vmul.f32 %v499, 0.01
  %v512 = vmul.f32 %v500, 0.01
  %v513 = vmul.f32 %v501, 0.01
  %v514 = vmul.f32 %v502, 0.01
  %v515 = vmul.f32 %v503, 0.01
  %v516 = vmul.f32 %v504, 0.01
  %v517 = vsel %vm505, %v499, %v511
  %v518 = vsel %vm506, %v500, %v512
  %v519 = vsel %vm507, %v501, %v513
  %v520 = vsel %vm508, %v502, %v514
  %v521 = vsel %vm509, %v503, %v515
  %v522 = vsel %vm510, %v504, %v516
  %v523 = vld [vmem:[%s2] sm:$0xff]
  %v524 = vld [vmem:[%s2 + $0x8] sm:$0xff]
  %v525 = vld [vmem:[%s2 + $0x10] sm:$0xff]
  %v527 = vsel %vm228, %v523, 0
  %v530 = vsel %vm228, %v524, 0
  %v533 = vsel %vm228, %v525, 0
  %535 = vmatpush.msra.mxu0 0.0
  %536 = vmatpush.msra.mxu0 0.0
  %537 = vmatpush.msra.mxu0 0.0
  %538 = vmatpush.msra.mxu0 0.0
  %539 = vmatpush.msra.mxu0 0.0
  %540 = vmatpush.msra.mxu0 0.0
  %541 = vmatpush.msra.mxu0 0.0
  %542 = vmatpush.msra.mxu0 0.0
  %543 = vmatpush.msra.mxu0 0.0
  %544 = vmatpush.msra.mxu0 0.0
  %545 = vmatpush.msra.mxu0 %v522
  %546 = vmatpush.msra.mxu0 %v521
  %547 = vmatpush.msra.mxu0 %v520
  %548 = vmatpush.msra.mxu0 %v519
  %549 = vmatpush.msra.mxu0 %v518
  %550 = vmatpush.msra.mxu0 %v517
  %551 = vmatmul.f32.gmra.mxu0 %v527
  %v552 = vpop.f32.mrf.mxu0
  %v553 = vadd.f32 0.0, %v552
  %554 = vmatmul.f32.gmra.mxu0 %v530
  %v555 = vpop.f32.mrf.mxu0
  %v556 = vadd.f32 0.0, %v555
  %557 = vmatmul.f32.gmra.mxu0 %v533
  %v558 = vpop.f32.mrf.mxu0
  %v559 = vadd.f32 0.0, %v558
  %560 = vdwg.mxu0
  %vm561 = vcmask 130048
  %562 = vst.msk [vmem:[%s7] sm:$0xff] %vm561, %v553
  %563 = vst.msk [vmem:[%s7 + $0x8] sm:$0xff] %vm561, %v556
  %564 = vst.msk [vmem:[%s7 + $0x10] sm:$0xff] %vm561, %v559
  // Predicated region
  $region30: #{model_forward.5} parent=0 // pred_check
    _
  $region31: #{model_forward.5} parent=0 // pred_check_branch
    %566 = sbr.rel (0) target = $region33
  $region32: #{model_forward.5} parent=0 // pred_region
    _
  $region33: #{model_forward.5} parent=0 // pred_fallthru
    _
  // Predicated region
  $region34: #{model_forward.5} parent=0 // pred_check
    _
  $region35: #{model_forward.5} parent=0 // pred_check_branch
    %568 = sbr.rel (0) target = $region37
  $region36: #{model_forward.5} parent=0 // pred_region
    _
  $region37: #{model_forward.5} parent=0 // pred_fallthru
    _

// kernel: model_forward.7
$region0: #{model_forward.7}
  #allocation0 [shape = 'u32[]', space=smem, size = 0x4, offset = 0x4, fixed_abs, tag = 'smem constant byte address 0x4 - core index']
  #allocation1 [shape = 'u32[72,128]{1,0:T(1,128)}', space=vmem, size = 0x9000, scoped, tag = 'internal scratch']
  %s0 = inlined_call_operand.vmem [shape: f32[2,320], index: 0, kind: input, shape index: {}]
  %s1 = inlined_call_operand.vmem [shape: f32[320,32], index: 1, kind: input, shape index: {}]
  %s2 = inlined_call_operand.vmem [shape: f32[1,32], index: 2, kind: input, shape index: {}]
  %s3 = inlined_call_operand.vmem [shape: f32[32,32], index: 3, kind: input, shape index: {}]
  %s4 = inlined_call_operand.vmem [shape: f32[1,32], index: 4, kind: input, shape index: {}]
  %s5 = inlined_call_operand.vmem [shape: f32[32,16], index: 5, kind: input, shape index: {}]
  %s6 = inlined_call_operand.vmem [shape: f32[1,16], index: 6, kind: input, shape index: {}]
  %s7 = inlined_call_operand.vmem [shape: f32[16,3], index: 7, kind: input, shape index: {}]
  %s8 = inlined_call_operand.vmem [shape: f32[1,3], index: 8, kind: input, shape index: {}]
  %s9 = inlined_call_operand.hbm [shape: f32[2,3], index: 9, kind: output, shape index: {}]
  %s10 = sld [smem:[#allocation0]]
  $region46: #{model_forward.7} parent=0
    _
  %s12 = ssub.s32 1, %s10
  %s13 = scalar_select 0, %s12, %s10
  $region1: #{model_forward.7} parent=0
    #allocation2 [shape = 'u8[1024]{0}', space=vmem, size = 0x400, scoped, tag = 'output window, operand 0, single buffered']
    #allocation3 [shape = 's32[1]{0}', space=sflag, size = 0x4, scoped, tag = 'scoped memory for model_forward.7']
    %14 = vsyncpa [#allocation3], 0
    // Predicated region
    $region2: #{model_forward.7} parent=1 // pred_check
      _
    $region3: #{model_forward.7} parent=1 // pred_check_branch
      %16 = sbr.rel (0) target = $region5
    $region4: #{model_forward.7} parent=1 // pred_region
      _
    $region5: #{model_forward.7} parent=1 // pred_fallthru
      _
    // Predicated region
    $region6: #{model_forward.7} parent=1 // pred_check
      _
    $region7: #{model_forward.7} parent=1 // pred_check_branch
      %18 = sbr.rel (0) target = $region9
    $region8: #{model_forward.7} parent=1 // pred_region
      _
    $region9: #{model_forward.7} parent=1 // pred_fallthru
      _
    // Predicated region
    $region10: #{model_forward.7} parent=1 // pred_check
      _
    $region11: #{model_forward.7} parent=1 // pred_check_branch
      %20 = sbr.rel (0) target = $region13
    $region12: #{model_forward.7} parent=1 // pred_region
      _
    $region13: #{model_forward.7} parent=1 // pred_fallthru
      _
    // Predicated region
    $region14: #{model_forward.7} parent=1 // pred_check
      _
    $region15: #{model_forward.7} parent=1 // pred_check_branch
      %22 = sbr.rel (0) target = $region17
    $region16: #{model_forward.7} parent=1 // pred_region
      _
    $region17: #{model_forward.7} parent=1 // pred_fallthru
      _
    // Predicated region
    $region18: #{model_forward.7} parent=1 // pred_check
      _
    $region19: #{model_forward.7} parent=1 // pred_check_branch
      %24 = sbr.rel (0) target = $region21
    $region20: #{model_forward.7} parent=1 // pred_region
      _
    $region21: #{model_forward.7} parent=1 // pred_fallthru
      _
    // Predicated region
    $region22: #{model_forward.7} parent=1 // pred_check
      _
    $region23: #{model_forward.7} parent=1 // pred_check_branch
      %26 = sbr.rel (0) target = $region25
    $region24: #{model_forward.7} parent=1 // pred_region
      _
    $region25: #{model_forward.7} parent=1 // pred_fallthru
      _
    // Predicated region
    $region26: #{model_forward.7} parent=1 // pred_check
      _
    $region27: #{model_forward.7} parent=1 // pred_check_branch
      %28 = sbr.rel (0) target = $region29
    $region28: #{model_forward.7} parent=1 // pred_region
      _
    $region29: #{model_forward.7} parent=1 // pred_fallthru
      _
    // Predicated region
    $region30: #{model_forward.7} parent=1 // pred_check
      _
    $region31: #{model_forward.7} parent=1 // pred_check_branch
      %30 = sbr.rel (0) target = $region33
    $region32: #{model_forward.7} parent=1 // pred_region
      _
    $region33: #{model_forward.7} parent=1 // pred_fallthru
      _
    // Predicated region
    $region34: #{model_forward.7} parent=1 // pred_check
      _
    $region35: #{model_forward.7} parent=1 // pred_check_branch
      %32 = sbr.rel (0) target = $region37
    $region36: #{model_forward.7} parent=1 // pred_region
      _
    $region37: #{model_forward.7} parent=1 // pred_fallthru
      _
    %v33 = vld [vmem:[%s0] sm:$0x3f]
    %v34 = vld [vmem:[%s1] sm:$0xff]
    %v35 = vld [vmem:[%s1 + $0x8] sm:$0xff]
    %v36 = vld [vmem:[%s1 + $0x10] sm:$0xff]
    %v37 = vld [vmem:[%s1 + $0x18] sm:$0xff]
    %v38 = vld [vmem:[%s1 + $0x20] sm:$0xff]
    %v39 = vld [vmem:[%s1 + $0x28] sm:$0xff]
    %v40 = vld [vmem:[%s1 + $0x30] sm:$0xff]
    %v41 = vld [vmem:[%s1 + $0x38] sm:$0xff]
    %v42 = vld [vmem:[%s1 + $0x40] sm:$0xff]
    %v43 = vld [vmem:[%s1 + $0x48] sm:$0xff]
    %v44 = vld [vmem:[%s1 + $0x50] sm:$0xff]
    %v45 = vld [vmem:[%s1 + $0x58] sm:$0xff]
    %v46 = vld [vmem:[%s1 + $0x60] sm:$0xff]
    %v47 = vld [vmem:[%s1 + $0x68] sm:$0xff]
    %v48 = vld [vmem:[%s1 + $0x70] sm:$0xff]
    %v49 = vld [vmem:[%s1 + $0x78] sm:$0xff]
    %v50 = vld [vmem:[%s1 + $0x80] sm:$0xff]
    %v51 = vld [vmem:[%s1 + $0x88] sm:$0xff]
    %v52 = vld [vmem:[%s1 + $0x90] sm:$0xff]
    %v53 = vld [vmem:[%s1 + $0x98] sm:$0xff]
    %v54 = vld [vmem:[%s1 + $0xa0] sm:$0xff]
    %v55 = vld [vmem:[%s1 + $0xa8] sm:$0xff]
    %v56 = vld [vmem:[%s1 + $0xb0] sm:$0xff]
    %v57 = vld [vmem:[%s1 + $0xb8] sm:$0xff]
    %v58 = vld [vmem:[%s1 + $0xc0] sm:$0xff]
    %v59 = vld [vmem:[%s1 + $0xc8] sm:$0xff]
    %v60 = vld [vmem:[%s1 + $0xd0] sm:$0xff]
    %v61 = vld [vmem:[%s1 + $0xd8] sm:$0xff]
    %v62 = vld [vmem:[%s1 + $0xe0] sm:$0xff]
    %v63 = vld [vmem:[%s1 + $0xe8] sm:$0xff]
    %v64 = vld [vmem:[%s1 + $0xf0] sm:$0xff]
    %v65 = vld [vmem:[%s1 + $0xf8] sm:$0xff]
    %v66 = vld [vmem:[%s1 + $0x100] sm:$0xff]
    %v67 = vld [vmem:[%s1 + $0x108] sm:$0xff]
    %v68 = vld [vmem:[%s1 + $0x110] sm:$0xff]
    %v69 = vld [vmem:[%s1 + $0x118] sm:$0xff]
    %v70 = vld [vmem:[%s1 + $0x120] sm:$0xff]
    %v71 = vld [vmem:[%s1 + $0x128] sm:$0xff]
    %v72 = vld [vmem:[%s1 + $0x130] sm:$0xff]
    %v73 = vld [vmem:[%s1 + $0x138] sm:$0xff]
    %v74 = vld [vmem:[%s2] sm:$0x1]
    %v76 = vperm.slane %v74, 0
    %79 = vst [vmem:[#allocation1] ss:$4 sm:$0xff] %v33
    %v80 = vld.sshfl [vmem:[#allocation1] sm:$0xff pattern:$0x73625140]
    %v81 = vld.sshfl [vmem:[#allocation1 + $0x8] sm:$0xff pattern:$0x73625140]
    %v82 = vld.sshfl [vmem:[#allocation1 + $0x10] sm:$0xff pattern:$0x73625140]
    %vm85 = vcmask 523264
    %v86 = vsel %vm85, %v82, 0
    %88 = vmatpush.msra.mxu0 %v49
    %89 = vmatpush.msra.mxu0 %v48
    %90 = vmatpush.msra.mxu0 %v47
    %91 = vmatpush.msra.mxu0 %v46
    %92 = vmatpush.msra.mxu0 %v45
    %93 = vmatpush.msra.mxu0 %v44
    %94 = vmatpush.msra.mxu0 %v43
    %95 = vmatpush.msra.mxu0 %v42
    %96 = vmatpush.msra.mxu0 %v41
    %97 = vmatpush.msra.mxu0 %v40
    %98 = vmatpush.msra.mxu0 %v39
    %99 = vmatpush.msra.mxu0 %v38
    %100 = vmatpush.msra.mxu0 %v37
    %101 = vmatpush.msra.mxu0 %v36
    %102 = vmatpush.msra.mxu0 %v35
    %103 = vmatpush.msra.mxu0 %v34
    %104 = vmatmul.f32.gmra.mxu0 %v80
    %v105 = vpop.f32.mrf.mxu0
    %v106 = vadd.f32 %v76, %v105
    %107 = vdwg.mxu0
    %108 = vmatpush.msra.mxu0 %v65
    %109 = vmatpush.msra.mxu0 %v64
    %110 = vmatpush.msra.mxu0 %v63
    %111 = vmatpush.msra.mxu0 %v62
    %112 = vmatpush.msra.mxu0 %v61
    %113 = vmatpush.msra.mxu0 %v60
    %114 = vmatpush.msra.mxu0 %v59
    %115 = vmatpush.msra.mxu0 %v58
    %116 = vmatpush.msra.mxu0 %v57
    %117 = vmatpush.msra.mxu0 %v56
    %118 = vmatpush.msra.mxu0 %v55
    %119 = vmatpush.msra.mxu0 %v54
    %120 = vmatpush.msra.mxu0 %v53
    %121 = vmatpush.msra.mxu0 %v52
    %122 = vmatpush.msra.mxu0 %v51
    %123 = vmatpush.msra.mxu0 %v50
    %124 = vmatmul.f32.gmra.mxu0 %v81
    %v125 = vpop.f32.mrf.mxu0
    %v126 = vadd.f32 %v106, %v125
    %127 = vdwg.mxu0
    %128 = vmatpush.msra.mxu0 0.0
    %129 = vmatpush.msra.mxu0 0.0
    %130 = vmatpush.msra.mxu0 0.0
    %131 = vmatpush.msra.mxu0 0.0
    %132 = vmatpush.msra.mxu0 0.0
    %133 = vmatpush.msra.mxu0 0.0
    %134 = vmatpush.msra.mxu0 0.0
    %135 = vmatpush.msra.mxu0 0.0
    %136 = vmatpush.msra.mxu0 %v73
    %137 = vmatpush.msra.mxu0 %v72
    %138 = vmatpush.msra.mxu0 %v71
    %139 = vmatpush.msra.mxu0 %v70
    %140 = vmatpush.msra.mxu0 %v69
    %141 = vmatpush.msra.mxu0 %v68
    %142 = vmatpush.msra.mxu0 %v67
    %143 = vmatpush.msra.mxu0 %v66
    %144 = vmatmul.f32.gmra.mxu0 %v86
    %v145 = vpop.f32.mrf.mxu0
    %v146 = vadd.f32 %v126, %v145
    %147 = vdwg.mxu0
    %v148 = vmax.f32 %v146, 0.0
    %v149 = vld [vmem:[%s3] sm:$0xff]
    %v150 = vld [vmem:[%s3 + $0x8] sm:$0xff]
    %v151 = vld [vmem:[%s3 + $0x10] sm:$0xff]
    %v152 = vld [vmem:[%s3 + $0x18] sm:$0xff]
    %v153 = vld [vmem:[%s4] sm:$0x1]
    %v155 = vperm.slane %v153, 0
    %vm157 = vcmask 261120
    %v159 = vsel %vm157, %v148, 0
    %161 = vmatpush.msra.mxu0 0.0
    %162 = vmatpush.msra.mxu0 0.0
    %163 = vmatpush.msra.mxu0 0.0
    %164 = vmatpush.msra.mxu0 0.0
    %165 = vmatpush.msra.mxu0 0.0
    %166 = vmatpush.msra.mxu0 0.0
    %167 = vmatpush.msra.mxu0 0.0
    %168 = vmatpush.msra.mxu0 0.0
    %169 = vmatpush.msra.mxu0 0.0
    %170 = vmatpush.msra.mxu0 0.0
    %171 = vmatpush.msra.mxu0 0.0
    %172 = vmatpush.msra.mxu0 0.0
    %173 = vmatpush.msra.mxu0 %v152
    %174 = vmatpush.msra.mxu0 %v151
    %175 = vmatpush.msra.mxu0 %v150
    %176 = vmatpush.msra.mxu0 %v149
    %177 = vmatmul.f32.gmra.mxu0 %v159
    %v178 = vpop.f32.mrf.mxu0
    %v179 = vadd.f32 %v155, %v178
    %180 = vdwg.mxu0
    %v181 = vmax.f32 %v179, 0.0
    %v182 = vld [vmem:[%s5] sm:$0xff]
    %v183 = vld [vmem:[%s5 + $0x8] sm:$0xff]
    %v184 = vld [vmem:[%s5 + $0x10] sm:$0xff]
    %v185 = vld [vmem:[%s5 + $0x18] sm:$0xff]
    %v186 = vld [vmem:[%s6] sm:$0x1]
    %v188 = vperm.slane %v186, 0
    %v191 = vsel %vm157, %v181, 0
    %193 = vmatpush.msra.mxu0 0.0
    %194 = vmatpush.msra.mxu0 0.0
    %195 = vmatpush.msra.mxu0 0.0
    %196 = vmatpush.msra.mxu0 0.0
    %197 = vmatpush.msra.mxu0 0.0
    %198 = vmatpush.msra.mxu0 0.0
    %199 = vmatpush.msra.mxu0 0.0
    %200 = vmatpush.msra.mxu0 0.0
    %201 = vmatpush.msra.mxu0 0.0
    %202 = vmatpush.msra.mxu0 0.0
    %203 = vmatpush.msra.mxu0 0.0
    %204 = vmatpush.msra.mxu0 0.0
    %205 = vmatpush.msra.mxu0 %v185
    %206 = vmatpush.msra.mxu0 %v184
    %207 = vmatpush.msra.mxu0 %v183
    %208 = vmatpush.msra.mxu0 %v182
    %209 = vmatmul.f32.gmra.mxu0 %v191
    %v210 = vpop.f32.mrf.mxu0
    %v211 = vadd.f32 %v188, %v210
    %212 = vdwg.mxu0
    %v213 = vmax.f32 %v211, 0.0
    %v214 = vld [vmem:[%s7] sm:$0xff]
    %v215 = vld [vmem:[%s7 + $0x8] sm:$0xff]
    %v216 = vld [vmem:[%s8] sm:$0x1]
    %v218 = vperm.slane %v216, 0
    %vm220 = vcmask 130048
    %v222 = vsel %vm220, %v213, 0
    %224 = vmatpush.msra.mxu0 0.0
    %225 = vmatpush.msra.mxu0 0.0
    %226 = vmatpush.msra.mxu0 0.0
    %227 = vmatpush.msra.mxu0 0.0
    %228 = vmatpush.msra.mxu0 0.0
    %229 = vmatpush.msra.mxu0 0.0
    %230 = vmatpush.msra.mxu0 0.0
    %231 = vmatpush.msra.mxu0 0.0
    %232 = vmatpush.msra.mxu0 0.0
    %233 = vmatpush.msra.mxu0 0.0
    %234 = vmatpush.msra.mxu0 0.0
    %235 = vmatpush.msra.mxu0 0.0
    %236 = vmatpush.msra.mxu0 0.0
    %237 = vmatpush.msra.mxu0 0.0
    %238 = vmatpush.msra.mxu0 %v215
    %239 = vmatpush.msra.mxu0 %v214
    %240 = vmatmul.f32.gmra.mxu0 %v222
    %v241 = vpop.f32.mrf.mxu0
    %v242 = vadd.f32 %v218, %v241
    %243 = vdwg.mxu0
    %vm244 = vcmask 17408
    %245 = vst.msk [vmem:[#allocation2] sm:$0x3] %vm244, %v242
    // Predicated region
    $region38: #{model_forward.7} parent=1 // pred_check
      _
    $region39: #{model_forward.7} parent=1 // pred_check_branch
      %247 = sbr.rel (0) target = $region41
    $region40: #{model_forward.7} parent=1 // pred_region
      %249 = vsyncadd [#allocation3], 0
      %s251 = sshll.u32 [#allocation2], 4
      %s252 = int_to_ptr.vmem [resolvable:$true] %s251
      %s253 = sshll.u32 %s9, 4
      %s254 = int_to_ptr.hbm [resolvable:$true] %s253
      %256 = dma.vmem_to_hbm [thread:$0]  %s252, 32, %s254, [#allocation3]
    $region41: #{model_forward.7} parent=1 // pred_fallthru
      _
    // Predicated region
    $region42: #{model_forward.7} parent=1 // pred_check
      _
    $region43: #{model_forward.7} parent=1 // pred_check_branch
      %258 = sbr.rel (0) target = $region45
    $region44: #{model_forward.7} parent=1 // pred_region
      %260 = dma.done [#allocation3], 32
    $region45: #{model_forward.7} parent=1 // pred_fallthru
      _
    %261 = vsyncpa [#allocation3], 1

</llo_original>
